<compile_context>
chip_gen: v7x
topology: tpu7x:2x2x1
jax: 0.10.0
libtpu: 0.0.40
codegen_flags: <defaults>
</compile_context>

<pallas_src>
import functools

import numpy as np
import jax
import jax.numpy as jnp
from jax.experimental import pallas as pl
from jax.experimental.pallas import tpu as pltpu

EPS = 1e-5  # nn.BatchNorm2d default


# --------------------------------------------------------------------------- #
# host-side helpers (trace-time constants / tile planning)
# --------------------------------------------------------------------------- #
def _make_tap_masks(H, W, b_tile):
    """(9, B_TILE*H*W) f32 validity masks for the 9 taps of a SAME 3x3 conv.

    The activation is flattened as B_TILE images concatenated along the lane
    axis; tap (ky, kx) reads offset (ky-1)*W + (kx-1) lanes away, so the mask
    zeroes lanes whose shifted source falls outside the *same* image (this also
    kills cross-image and wrap-around contamination of the circular shift)."""
    HW = H * W
    L = b_tile * HW
    p = np.arange(L)
    yy = (p % HW) // W
    xx = p % W
    masks = np.empty((9, L), np.float32)
    for ky in range(3):
        for kx in range(3):
            dy, dx = ky - 1, kx - 1
            valid = ((yy + dy >= 0) & (yy + dy < H) &
                     (xx + dx >= 0) & (xx + dx < W))
            masks[ky * 3 + kx] = valid.astype(np.float32)
    return jnp.asarray(masks)


def _pick_b_tile(n, hw, c_max, target_lanes=2048, vmem_budget=8 * 1024 * 1024):
    """Largest divisor B_TILE of n such that
       * the grid keeps >= 2 steps (both v7x TensorCores get work),
       * the per-step lane extent targets ~target_lanes,
       * the f32 tap matrix (9*C, B_TILE*HW) stays within a small VMEM budget."""
    by_lanes = max(1, target_lanes // hw)
    by_vmem = max(1, vmem_budget // max(1, 9 * c_max * hw * 4))
    cap = max(1, min(by_lanes, by_vmem))
    best = 1
    for bt in range(1, n + 1):
        if n % bt or bt > cap:
            continue
        if n // bt >= 2 or n == 1:
            best = bt
    return best


def _vmem_limit_bytes():
    """Per-generation VMEM budget: half of physical VMEM, capped at 64 MiB
    (128 MiB on v5e/v6e -> 64 MiB limit; 64 MiB on v7x -> 32 MiB limit)."""
    try:
        cap = int(pltpu.get_tpu_info().vmem_capacity_bytes)
    except Exception:
        cap = 128 * 1024 * 1024
    return int(min(max(cap // 2, 16 * 1024 * 1024), 64 * 1024 * 1024))


# --------------------------------------------------------------------------- #
# in-kernel helpers
# --------------------------------------------------------------------------- #
def _lane_shift(x, off):
    """Lane-dense circular shift: result[:, p] = x[:, (p + off) % L].

    Two lane-dense slices + one lane concat (== jnp.roll(x, -off, axis=-1));
    pltpu.roll(x, shift=(-off) % L, axis=1) is the single-XLU-op equivalent.
    Wrapped lanes are zeroed by the caller's border mask."""
    L = x.shape[-1]
    k = off % L
    if k == 0:
        return x
    return jnp.concatenate([x[:, k:], x[:, :k]], axis=-1)


def _im2col_taps(x_flat, mask_ref, W):
    """Tap-folded bf16 patch matrix (9*C, L) from a lane-dense (C, L) f32
    activation (B_TILE images concatenated along the lane axis).

    Row block tap = ky*3 + kx holds the activation shifted by (ky-1, kx-1) and
    masked at image borders, matching weights folded as (O, ky, kx, I) ->
    (O, 9*I); one MXU matmul then implements the SAME-padded 3x3 conv for all
    B_TILE images at once."""
    taps = []
    for ky in range(3):
        for kx in range(3):
            off = (ky - 1) * W + (kx - 1)
            if off == 0:
                taps.append(x_flat)                       # centre tap: identity
            else:
                t = ky * 3 + kx
                taps.append(_lane_shift(x_flat, off) * mask_ref[t:t + 1, :])
    return jnp.concatenate(taps, axis=0).astype(jnp.bfloat16)


def _channel_stats(acc):
    """Per-channel (mean, M2) of a lane-dense (C, L) f32 tile (centered form)."""
    n = acc.shape[1]
    mean = jnp.sum(acc, axis=1, keepdims=True) * (1.0 / n)       # (C, 1)
    c = acc - mean
    m2 = jnp.sum(c * c, axis=1, keepdims=True)                   # (C, 1)
    return jnp.concatenate([mean, m2], axis=1)                   # (C, 2)


# --------------------------------------------------------------------------- #
# kernels
# --------------------------------------------------------------------------- #
def _conv1_stats_kernel(x_ref, w_ref, mask_ref, y_ref, stats_ref, *, W):
    # x_ref:     (B_TILE, Cin, H*W) f32   input block (NCHW, HW flattened)
    # w_ref:     (Cout, 9*Cin)      bf16  tap-folded conv1 weights
    # mask_ref:  (9, B_TILE*H*W)    f32   tap border masks
    # y_ref:     (1, Cout, B_TILE*H*W) bf16 raw conv1 output (bias-free)
    # stats_ref: (1, Cout, 2)       f32   per-step [mean, M2]
    b_tile = x_ref.shape[0]
    # Concatenate the B_TILE images along the (128-aligned) lane axis.
    x_flat = jnp.concatenate([x_ref[b] for b in range(b_tile)], axis=-1)
    col = _im2col_taps(x_flat.astype(jnp.float32), mask_ref, W)   # (9*Cin, L)
    acc = jnp.dot(w_ref[...], col,
                  preferred_element_type=jnp.float32)             # (Cout, L) f32
    y_ref[0] = acc.astype(y_ref.dtype)
    stats_ref[0] = _channel_stats(acc)


def _bn_relu_conv_stats_kernel(y_in_ref, s_ref, t_ref, w_ref, mask_ref,
                               y_ref, stats_ref, *, W):
    # y_in_ref: (1, Cout, L) bf16  raw conv1 output
    # s_ref/t_ref: (Cout, 1)  f32  fused BN1 scale / shift (global stats)
    # w_ref:    (Cout, 9*Cout) bf16 tap-folded conv2 weights
    a = jnp.maximum(
        y_in_ref[0].astype(jnp.float32) * s_ref[...] + t_ref[...], 0.0)
    col = _im2col_taps(a, mask_ref, W)                             # (9*Cout, L)
    acc = jnp.dot(w_ref[...], col,
                  preferred_element_type=jnp.float32)              # (Cout, L)
    y_ref[0] = acc.astype(y_ref.dtype)
    stats_ref[0] = _channel_stats(acc)


def _bn_relu_out_kernel(y_in_ref, s_ref, t_ref, o_ref):
    # BN2 + ReLU + de-interleave the B_TILE images back to NCHW layout.
    b_tile, _, hw = o_ref.shape
    a = jnp.maximum(
        y_in_ref[0].astype(jnp.float32) * s_ref[...] + t_ref[...], 0.0)
    for b in range(b_tile):                       # 128-aligned lane slices
        o_ref[b] = a[:, b * hw:(b + 1) * hw].astype(o_ref.dtype)


# --------------------------------------------------------------------------- #
# wrapper-side statistics combination (tiny arrays)
# --------------------------------------------------------------------------- #
def _combine_stats(stats, n_per_block):
    """Combine per-block (mean, M2) into global mean / biased var (Chan).
    All blocks have equal size n_per_block = B_TILE*H*W (B_TILE divides N)."""
    mean_b = stats[:, :, 0]                                      # (G, C)
    m2_b = stats[:, :, 1]                                        # (G, C)
    n_blocks = stats.shape[0]
    mean = jnp.mean(mean_b, axis=0)
    total_m2 = (jnp.sum(m2_b, axis=0)
                + n_per_block * jnp.sum((mean_b - mean) ** 2, axis=0))
    var = total_m2 / (n_blocks * n_per_block)
    return mean, var


def _affine_from_stats(stats, gamma, beta, n_per_block):
    mean, var = _combine_stats(stats, n_per_block)
    scale = gamma * jax.lax.rsqrt(var + EPS)
    shift = beta - mean * scale
    c = scale.shape[0]
    return (scale.reshape(c, 1).astype(jnp.float32),
            shift.reshape(c, 1).astype(jnp.float32))


# --------------------------------------------------------------------------- #
# public forward
# --------------------------------------------------------------------------- #
@jax.jit
def conv_block_forward(x_nchw, params):
    """PyTorch conv_block forward (training-mode BN). (N,Cin,H,W)->(N,Cout,H,W)."""
    w1, b1, g1, be1, w2, b2, g2, be2 = params
    # Conv biases cancel exactly inside training-mode BatchNorm (mean
    # subtraction; variance is shift-invariant), so they are not used.
    del b1, b2

    N, Cin, H, W = x_nchw.shape
    Cout = w1.shape[0]
    HW = H * W

    b_tile = _pick_b_tile(N, HW, max(Cin, Cout))   # grid keeps >= 2 steps (v7x)
    G = N // b_tile
    L = b_tile * HW

    x = x_nchw.reshape(N, Cin, HW).astype(jnp.float32)
    masks = _make_tap_masks(H, W, b_tile)          # (9, L) f32, trace-time const

    # Tap-folded weights: (O,I,3,3) -> (O, ky, kx, I) -> (O, 9*I); bf16 for MXU.
    w1_mat = jnp.transpose(w1, (0, 2, 3, 1)).reshape(Cout, 9 * Cin).astype(jnp.bfloat16)
    w2_mat = jnp.transpose(w2, (0, 2, 3, 1)).reshape(Cout, 9 * Cout).astype(jnp.bfloat16)

    cparams = pltpu.CompilerParams(
        dimension_semantics=("parallel",),          # batch tiles are independent
        vmem_limit_bytes=_vmem_limit_bytes())

    const2 = lambda b: (0, 0)                       # loop-invariant operands
    blk3 = lambda b: (b, 0, 0)

    # ---- pass 1: conv1 (bias-free, one MXU matmul) + per-step BN1 stats ----
    y1, st1 = pl.pallas_call(
        functools.partial(_conv1_stats_kernel, W=W),
        grid=(G,),
        in_specs=[
            pl.BlockSpec((b_tile, Cin, HW), blk3),
            pl.BlockSpec((Cout, 9 * Cin), const2),
            pl.BlockSpec((9, L), const2),
        ],
        out_specs=(
            pl.BlockSpec((1, Cout, L), blk3),
            pl.BlockSpec((1, Cout, 2), blk3),
        ),
        out_shape=(
            jax.ShapeDtypeStruct((G, Cout, L), jnp.bfloat16),   # bf16 intermediate
            jax.ShapeDtypeStruct((G, Cout, 2), jnp.float32),
        ),
        compiler_params=cparams,
    )(x, w1_mat, masks)

    s1, t1 = _affine_from_stats(st1, g1, be1, L)

    # ---- pass 2: BN1 + ReLU + conv2 (bias-free) + per-step BN2 stats -------
    y2, st2 = pl.pallas_call(
        functools.partial(_bn_relu_conv_stats_kernel, W=W),
        grid=(G,),
        in_specs=[
            pl.BlockSpec((1, Cout, L), blk3),
            pl.BlockSpec((Cout, 1), const2),
            pl.BlockSpec((Cout, 1), const2),
            pl.BlockSpec((Cout, 9 * Cout), const2),
            pl.BlockSpec((9, L), const2),
        ],
        out_specs=(
            pl.BlockSpec((1, Cout, L), blk3),
            pl.BlockSpec((1, Cout, 2), blk3),
        ),
        out_shape=(
            jax.ShapeDtypeStruct((G, Cout, L), jnp.bfloat16),   # bf16 intermediate
            jax.ShapeDtypeStruct((G, Cout, 2), jnp.float32),
        ),
        compiler_params=cparams,
    )(y1, s1, t1, w2_mat, masks)

    s2, t2 = _affine_from_stats(st2, g2, be2, L)

    # ---- pass 3: BN2 + ReLU, streamed in B_TILE-wide lane-dense blocks -----
    out = pl.pallas_call(
        _bn_relu_out_kernel,
        grid=(G,),
        in_specs=[
            pl.BlockSpec((1, Cout, L), blk3),
            pl.BlockSpec((Cout, 1), const2),
            pl.BlockSpec((Cout, 1), const2),
        ],
        out_specs=pl.BlockSpec((b_tile, Cout, HW), blk3),
        out_shape=jax.ShapeDtypeStruct((N, Cout, HW), jnp.float32),
        compiler_params=cparams,
    )(y2, s2, t2)

    # (N, Cout, H*W) -> (N, Cout, H, W): contiguity-preserving reshape.
    return out.reshape(N, Cout, H, W)


# --------------------------------------------------------------------------- #
# pure-JAX reference (PyTorch conv_block semantics, training-mode BN)
# --------------------------------------------------------------------------- #
def reference_forward(x, params, *, bf16_conv_operands=False):
    """f32 reference.  With bf16_conv_operands=True the conv inputs/weights are
    rounded to bf16 like the MXU-native kernels (kernels additionally round the
    intermediate conv outputs to bf16 for HBM traffic; see tolerances below)."""
    w1, b1, g1, be1, w2, b2, g2, be2 = params

    def conv(x, w, b):
        if bf16_conv_operands:
            x = x.astype(jnp.bfloat16).astype(jnp.float32)
            w = w.astype(jnp.bfloat16).astype(jnp.float32)
        y = jax.lax.conv_general_dilated(
            x, w, window_strides=(1, 1), padding="SAME",
            dimension_numbers=("NCHW", "OIHW", "NCHW"),
            precision=jax.lax.Precision.HIGHEST)
        return y + b[None, :, None, None]

    def bn_relu(x, g, be):
        mean = jnp.mean(x, axis=(0, 2, 3), keepdims=True)
        var = jnp.mean((x - mean) ** 2, axis=(0, 2, 3), keepdims=True)
        y = (x - mean) * jax.lax.rsqrt(var + EPS)
        y = y * g[None, :, None, None] + be[None, :, None, None]
        return jnp.maximum(y, 0.0)

    x = bn_relu(conv(x, w1, b1), g1, be1)
    x = bn_relu(conv(x, w2, b2), g2, be2)
    return x


if __name__ == "__main__":
    # small shapes consistent with the module: in_c=4, out_c=8
    N, Cin, Cout, H, W = 2, 4, 8, 16, 16

    key = jax.random.PRNGKey(0)
    ks = jax.random.split(key, 9)
    x = jax.random.normal(ks[0], (N, Cin, H, W), jnp.float32)

    # deterministic parameter init (shapes per nn.Conv2d / nn.BatchNorm2d)
    w1 = 0.1 * jax.random.normal(ks[1], (Cout, Cin, 3, 3), jnp.float32)
    b1 = 0.1 * jax.random.normal(ks[2], (Cout,), jnp.float32)
    g1 = 1.0 + 0.1 * jax.random.normal(ks[3], (Cout,), jnp.float32)
    be1 = 0.1 * jax.random.normal(ks[4], (Cout,), jnp.float32)
    w2 = 0.1 * jax.random.normal(ks[5], (Cout, Cout, 3, 3), jnp.float32)
    b2 = 0.1 * jax.random.normal(ks[6], (Cout,), jnp.float32)
    g2 = 1.0 + 0.1 * jax.random.normal(ks[7], (Cout,), jnp.float32)
    be2 = 0.1 * jax.random.normal(ks[8], (Cout,), jnp.float32)
    params = (w1, b1, g1, be1, w2, b2, g2, be2)

    out = jax.block_until_ready(conv_block_forward(x, params))
    assert out.shape == (N, Cout, H, W), out.shape

    # Check vs a reference that mirrors the kernels' bf16 MXU operands.  The
    # kernels additionally store the intermediate conv outputs in bf16 (HBM
    # traffic), so the tolerance covers bf16-eps rounding propagated through
    # BN + the second conv (~a few 1e-2 worst case at these magnitudes).
    ref_bf16 = jax.block_until_ready(
        reference_forward(x, params, bf16_conv_operands=True))
    assert jnp.allclose(out, ref_bf16, atol=5e-2, rtol=5e-2), (
        float(jnp.max(jnp.abs(out - ref_bf16))))

    # Looser sanity check vs the pure-f32 reference (adds the bf16 operand
    # rounding of the MXU matmuls on top of the intermediate rounding).
    ref_f32 = jax.block_until_ready(reference_forward(x, params))
    assert jnp.allclose(out, ref_f32, atol=1e-1, rtol=1e-1), (
        float(jnp.max(jnp.abs(out - ref_f32))))

    print("KERNEL_OK")
</pallas_src>

<mosaic_0001>
module attributes {stable_mosaic.version = 11 : i64} {
  func.func @_bn_relu_out_kernel(%arg0: i32, %arg1: memref<1x8x256xbf16, #tpu.memory_space<vmem>>, %arg2: memref<8x1xf32, #tpu.memory_space<vmem>>, %arg3: memref<8x1xf32, #tpu.memory_space<vmem>>, %arg4: memref<1x8x256xf32, #tpu.memory_space<vmem>>) attributes {dimension_semantics = [#tpu.dimension_semantics<parallel>], iteration_bounds = array<i64: 2>, scalar_prefetch = 0 : i64, scratch_operands = 0 : i64, tpu.core_type = #tpu.core_type<tc>, window_params = [{transform_indices = @transform_0, window_bounds = array<i64: 1, 8, 256>}, {pipeline_mode = #tpu.pipeline_mode<synchronous>, transform_indices = @transform_1, window_bounds = array<i64: 8, 1>}, {pipeline_mode = #tpu.pipeline_mode<synchronous>, transform_indices = @transform_2, window_bounds = array<i64: 8, 1>}, {transform_indices = @transform_3, window_bounds = array<i64: 1, 8, 256>}]} {
    %c0 = arith.constant 0 : index
    %c0_0 = arith.constant 0 : index
    %c0_1 = arith.constant 0 : index
    %0 = vector.load %arg1[%c0, %c0_0, %c0_1] : memref<1x8x256xbf16, #tpu.memory_space<vmem>>, vector<1x8x256xbf16>
    %1 = vector.shape_cast %0 : vector<1x8x256xbf16> to vector<8x256xbf16>
    %2 = arith.extf %1 : vector<8x256xbf16> to vector<8x256xf32>
    %c0_2 = arith.constant 0 : index
    %c0_3 = arith.constant 0 : index
    %3 = vector.load %arg2[%c0_2, %c0_3] : memref<8x1xf32, #tpu.memory_space<vmem>>, vector<8x1xf32>
    %4 = vector.broadcast %3 : vector<8x1xf32> to vector<8x256xf32>
    %5 = arith.mulf %2, %4 : vector<8x256xf32>
    %c0_4 = arith.constant 0 : index
    %c0_5 = arith.constant 0 : index
    %6 = vector.load %arg3[%c0_4, %c0_5] : memref<8x1xf32, #tpu.memory_space<vmem>>, vector<8x1xf32>
    %7 = vector.broadcast %6 : vector<8x1xf32> to vector<8x256xf32>
    %8 = arith.addf %5, %7 : vector<8x256xf32>
    %cst = arith.constant 0.000000e+00 : f32
    %9 = vector.broadcast %cst : f32 to vector<8x256xf32>
    %10 = arith.maximumf %8, %9 : vector<8x256xf32>
    %c0_6 = arith.constant 0 : index
    %c0_7 = arith.constant 0 : index
    %c0_8 = arith.constant 0 : index
    %11 = vector.load %arg4[%c0_6, %c0_7, %c0_8] : memref<1x8x256xf32, #tpu.memory_space<vmem>>, vector<1x8x256xf32>
    %12 = vector.shape_cast %11 : vector<1x8x256xf32> to vector<8x256xf32>
    %13 = vector.shape_cast %10 : vector<8x256xf32> to vector<1x8x256xf32>
    tpu.vector_store %arg4[%c0_6, %c0_7, %c0_8], %13 {strides = array<i32>} : memref<1x8x256xf32, #tpu.memory_space<vmem>>, vector<1x8x256xf32>,
    return
  }
  func.func @transform_0(%arg0: i32) -> (i32, i32, i32) {
    %c0_i32 = arith.constant 0 : i32
    %c0_i32_0 = arith.constant 0 : i32
    %c0_i32_1 = arith.constant 0 : i32
    return %arg0, %c0_i32, %c0_i32_0 : i32, i32, i32
  }
  func.func @transform_1(%arg0: i32) -> (i32, i32) {
    %c0_i32 = arith.constant 0 : i32
    %c0_i32_0 = arith.constant 0 : i32
    %c0_i32_1 = arith.constant 0 : i32
    return %c0_i32, %c0_i32_0 : i32, i32
  }
  func.func @transform_2(%arg0: i32) -> (i32, i32) {
    %c0_i32 = arith.constant 0 : i32
    %c0_i32_0 = arith.constant 0 : i32
    %c0_i32_1 = arith.constant 0 : i32
    return %c0_i32, %c0_i32_0 : i32, i32
  }
  func.func @transform_3(%arg0: i32) -> (i32, i32, i32) {
    %c0_i32 = arith.constant 0 : i32
    %c0_i32_0 = arith.constant 0 : i32
    %c0_i32_1 = arith.constant 0 : i32
    return %arg0, %c0_i32, %c0_i32_0 : i32, i32, i32
  }
}

module attributes {stable_mosaic.version = 11 : i64} {
  func.func @_conv1_stats_kernel(%arg0: i32, %arg1: memref<1x4x256xf32, #tpu.memory_space<vmem>>, %arg2: memref<8x36xbf16, #tpu.memory_space<vmem>>, %arg3: memref<9x256xf32, #tpu.memory_space<vmem>>, %arg4: memref<1x8x256xbf16, #tpu.memory_space<vmem>>, %arg5: memref<1x8x2xf32, #tpu.memory_space<vmem>>) attributes {dimension_semantics = [#tpu.dimension_semantics<parallel>], iteration_bounds = array<i64: 2>, scalar_prefetch = 0 : i64, scratch_operands = 0 : i64, tpu.core_type = #tpu.core_type<tc>, window_params = [{transform_indices = @transform_0, window_bounds = array<i64: 1, 4, 256>}, {pipeline_mode = #tpu.pipeline_mode<synchronous>, transform_indices = @transform_1, window_bounds = array<i64: 8, 36>}, {pipeline_mode = #tpu.pipeline_mode<synchronous>, transform_indices = @transform_2, window_bounds = array<i64: 9, 256>}, {transform_indices = @transform_3, window_bounds = array<i64: 1, 8, 256>}, {transform_indices = @transform_4, window_bounds = array<i64: 1, 8, 2>}]} {
    %c0 = arith.constant 0 : index
    %c0_0 = arith.constant 0 : index
    %c0_1 = arith.constant 0 : index
    %0 = vector.load %arg1[%c0, %c0_0, %c0_1] : memref<1x4x256xf32, #tpu.memory_space<vmem>>, vector<1x4x256xf32>
    %1 = vector.shape_cast %0 : vector<1x4x256xf32> to vector<4x256xf32>
    %2 = vector.extract_strided_slice %1 {offsets = [0, 239], sizes = [4, 17], strides = [1, 1]} : vector<4x256xf32> to vector<4x17xf32>
    %3 = vector.extract_strided_slice %1 {offsets = [0, 0], sizes = [4, 239], strides = [1, 1]} : vector<4x256xf32> to vector<4x239xf32>
    %4 = tpu.concatenate %2, %3 in 1 : vector<4x17xf32>, vector<4x239xf32> -> vector<4x256xf32>
    %c0_2 = arith.constant 0 : index
    %c0_3 = arith.constant 0 : index
    %5 = vector.load %arg3[%c0_2, %c0_3] : memref<9x256xf32, #tpu.memory_space<vmem>>, vector<1x256xf32>
    %6 = vector.broadcast %5 : vector<1x256xf32> to vector<4x256xf32>
    %7 = arith.mulf %4, %6 : vector<4x256xf32>
    %8 = vector.extract_strided_slice %1 {offsets = [0, 240], sizes = [4, 16], strides = [1, 1]} : vector<4x256xf32> to vector<4x16xf32>
    %9 = vector.extract_strided_slice %1 {offsets = [0, 0], sizes = [4, 240], strides = [1, 1]} : vector<4x256xf32> to vector<4x240xf32>
    %10 = tpu.concatenate %8, %9 in 1 : vector<4x16xf32>, vector<4x240xf32> -> vector<4x256xf32>
    %c1 = arith.constant 1 : index
    %c0_4 = arith.constant 0 : index
    %11 = vector.load %arg3[%c1, %c0_4] : memref<9x256xf32, #tpu.memory_space<vmem>>, vector<1x256xf32>
    %12 = vector.broadcast %11 : vector<1x256xf32> to vector<4x256xf32>
    %13 = arith.mulf %10, %12 : vector<4x256xf32>
    %14 = vector.extract_strided_slice %1 {offsets = [0, 241], sizes = [4, 15], strides = [1, 1]} : vector<4x256xf32> to vector<4x15xf32>
    %15 = vector.extract_strided_slice %1 {offsets = [0, 0], sizes = [4, 241], strides = [1, 1]} : vector<4x256xf32> to vector<4x241xf32>
    %16 = tpu.concatenate %14, %15 in 1 : vector<4x15xf32>, vector<4x241xf32> -> vector<4x256xf32>
    %c2 = arith.constant 2 : index
    %c0_5 = arith.constant 0 : index
    %17 = vector.load %arg3[%c2, %c0_5] : memref<9x256xf32, #tpu.memory_space<vmem>>, vector<1x256xf32>
    %18 = vector.broadcast %17 : vector<1x256xf32> to vector<4x256xf32>
    %19 = arith.mulf %16, %18 : vector<4x256xf32>
    %20 = vector.extract_strided_slice %1 {offsets = [0, 255], sizes = [4, 1], strides = [1, 1]} : vector<4x256xf32> to vector<4x1xf32>
    %21 = vector.extract_strided_slice %1 {offsets = [0, 0], sizes = [4, 255], strides = [1, 1]} : vector<4x256xf32> to vector<4x255xf32>
    %22 = tpu.concatenate %20, %21 in 1 : vector<4x1xf32>, vector<4x255xf32> -> vector<4x256xf32>
    %c3 = arith.constant 3 : index
    %c0_6 = arith.constant 0 : index
    %23 = vector.load %arg3[%c3, %c0_6] : memref<9x256xf32, #tpu.memory_space<vmem>>, vector<1x256xf32>
    %24 = vector.broadcast %23 : vector<1x256xf32> to vector<4x256xf32>
    %25 = arith.mulf %22, %24 : vector<4x256xf32>
    %26 = vector.extract_strided_slice %1 {offsets = [0, 1], sizes = [4, 255], strides = [1, 1]} : vector<4x256xf32> to vector<4x255xf32>
    %27 = vector.extract_strided_slice %1 {offsets = [0, 0], sizes = [4, 1], strides = [1, 1]} : vector<4x256xf32> to vector<4x1xf32>
    %28 = tpu.concatenate %26, %27 in 1 : vector<4x255xf32>, vector<4x1xf32> -> vector<4x256xf32>
    %c5 = arith.constant 5 : index
    %c0_7 = arith.constant 0 : index
    %29 = vector.load %arg3[%c5, %c0_7] : memref<9x256xf32, #tpu.memory_space<vmem>>, vector<1x256xf32>
    %30 = vector.broadcast %29 : vector<1x256xf32> to vector<4x256xf32>
    %31 = arith.mulf %28, %30 : vector<4x256xf32>
    %32 = vector.extract_strided_slice %1 {offsets = [0, 15], sizes = [4, 241], strides = [1, 1]} : vector<4x256xf32> to vector<4x241xf32>
    %33 = vector.extract_strided_slice %1 {offsets = [0, 0], sizes = [4, 15], strides = [1, 1]} : vector<4x256xf32> to vector<4x15xf32>
    %34 = tpu.concatenate %32, %33 in 1 : vector<4x241xf32>, vector<4x15xf32> -> vector<4x256xf32>
    %c6 = arith.constant 6 : index
    %c0_8 = arith.constant 0 : index
    %35 = vector.load %arg3[%c6, %c0_8] : memref<9x256xf32, #tpu.memory_space<vmem>>, vector<1x256xf32>
    %36 = vector.broadcast %35 : vector<1x256xf32> to vector<4x256xf32>
    %37 = arith.mulf %34, %36 : vector<4x256xf32>
    %38 = vector.extract_strided_slice %1 {offsets = [0, 16], sizes = [4, 240], strides = [1, 1]} : vector<4x256xf32> to vector<4x240xf32>
    %39 = vector.extract_strided_slice %1 {offsets = [0, 0], sizes = [4, 16], strides = [1, 1]} : vector<4x256xf32> to vector<4x16xf32>
    %40 = tpu.concatenate %38, %39 in 1 : vector<4x240xf32>, vector<4x16xf32> -> vector<4x256xf32>
    %c7 = arith.constant 7 : index
    %c0_9 = arith.constant 0 : index
    %41 = vector.load %arg3[%c7, %c0_9] : memref<9x256xf32, #tpu.memory_space<vmem>>, vector<1x256xf32>
    %42 = vector.broadcast %41 : vector<1x256xf32> to vector<4x256xf32>
    %43 = arith.mulf %40, %42 : vector<4x256xf32>
    %44 = vector.extract_strided_slice %1 {offsets = [0, 17], sizes = [4, 239], strides = [1, 1]} : vector<4x256xf32> to vector<4x239xf32>
    %45 = vector.extract_strided_slice %1 {offsets = [0, 0], sizes = [4, 17], strides = [1, 1]} : vector<4x256xf32> to vector<4x17xf32>
    %46 = tpu.concatenate %44, %45 in 1 : vector<4x239xf32>, vector<4x17xf32> -> vector<4x256xf32>
    %c8 = arith.constant 8 : index
    %c0_10 = arith.constant 0 : index
    %47 = vector.load %arg3[%c8, %c0_10] : memref<9x256xf32, #tpu.memory_space<vmem>>, vector<1x256xf32>
    %48 = vector.broadcast %47 : vector<1x256xf32> to vector<4x256xf32>
    %49 = arith.mulf %46, %48 : vector<4x256xf32>
    %50 = tpu.concatenate %7, %13, %19, %25, %1, %31, %37, %43, %49 in 0 : vector<4x256xf32>, vector<4x256xf32>, vector<4x256xf32>, vector<4x256xf32>, vector<4x256xf32>, vector<4x256xf32>, vector<4x256xf32>, vector<4x256xf32>, vector<4x256xf32> -> vector<36x256xf32>
    %51 = arith.truncf %50 : vector<36x256xf32> to vector<36x256xbf16>
    %c0_11 = arith.constant 0 : index
    %c0_12 = arith.constant 0 : index
    %52 = vector.load %arg2[%c0_11, %c0_12] : memref<8x36xbf16, #tpu.memory_space<vmem>>, vector<8x36xbf16>
    %cst = arith.constant dense<0.000000e+00> : vector<8x256xf32>
    %53 = tpu.matmul %52, %51, %cst {dimension_numbers = #tpu.dot_dimension_numbers<[1], [0], [0], [1], [0, 0, 1, 1], [], []>} : vector<8x36xbf16>, vector<36x256xbf16>, vector<8x256xf32> -> vector<8x256xf32>
    %54 = arith.truncf %53 : vector<8x256xf32> to vector<8x256xbf16>
    %c0_13 = arith.constant 0 : index
    %c0_14 = arith.constant 0 : index
    %c0_15 = arith.constant 0 : index
    %55 = vector.load %arg4[%c0_13, %c0_14, %c0_15] : memref<1x8x256xbf16, #tpu.memory_space<vmem>>, vector<1x8x256xbf16>
    %56 = vector.shape_cast %55 : vector<1x8x256xbf16> to vector<8x256xbf16>
    %57 = vector.shape_cast %54 : vector<8x256xbf16> to vector<1x8x256xbf16>
    tpu.vector_store %arg4[%c0_13, %c0_14, %c0_15], %57 {strides = array<i32>} : memref<1x8x256xbf16, #tpu.memory_space<vmem>>, vector<1x8x256xbf16>,
    %cst_16 = arith.constant dense<0.000000e+00> : vector<8xf32>
    %58 = vector.multi_reduction <add>, %53, %cst_16 [1] : vector<8x256xf32> to vector<8xf32>
    %59 = vector.shape_cast %58 : vector<8xf32> to vector<8x1xf32>
    %cst_17 = arith.constant 3.906250e-03 : f32
    %60 = vector.broadcast %cst_17 : f32 to vector<8x1xf32>
    %61 = arith.mulf %59, %60 : vector<8x1xf32>
    %62 = vector.broadcast %61 : vector<8x1xf32> to vector<8x256xf32>
    %63 = arith.subf %53, %62 : vector<8x256xf32>
    %64 = arith.mulf %63, %63 : vector<8x256xf32>
    %cst_18 = arith.constant dense<0.000000e+00> : vector<8xf32>
    %65 = vector.multi_reduction <add>, %64, %cst_18 [1] : vector<8x256xf32> to vector<8xf32>
    %66 = vector.shape_cast %65 : vector<8xf32> to vector<8x1xf32>
    %67 = tpu.concatenate %61, %66 in 1 : vector<8x1xf32>, vector<8x1xf32> -> vector<8x2xf32>
    %c0_19 = arith.constant 0 : index
    %c0_20 = arith.constant 0 : index
    %c0_21 = arith.constant 0 : index
    %68 = vector.load %arg5[%c0_19, %c0_20, %c0_21] : memref<1x8x2xf32, #tpu.memory_space<vmem>>, vector<1x8x2xf32>
    %69 = vector.shape_cast %68 : vector<1x8x2xf32> to vector<8x2xf32>
    %70 = vector.shape_cast %67 : vector<8x2xf32> to vector<1x8x2xf32>
    tpu.vector_store %arg5[%c0_19, %c0_20, %c0_21], %70 {strides = array<i32>} : memref<1x8x2xf32, #tpu.memory_space<vmem>>, vector<1x8x2xf32>,
    return
  }
  func.func @transform_0(%arg0: i32) -> (i32, i32, i32) {
    %c0_i32 = arith.constant 0 : i32
    %c0_i32_0 = arith.constant 0 : i32
    %c0_i32_1 = arith.constant 0 : i32
    return %arg0, %c0_i32, %c0_i32_0 : i32, i32, i32
  }
  func.func @transform_1(%arg0: i32) -> (i32, i32) {
    %c0_i32 = arith.constant 0 : i32
    %c0_i32_0 = arith.constant 0 : i32
    %c0_i32_1 = arith.constant 0 : i32
    return %c0_i32, %c0_i32_0 : i32, i32
  }
  func.func @transform_2(%arg0: i32) -> (i32, i32) {
    %c0_i32 = arith.constant 0 : i32
    %c0_i32_0 = arith.constant 0 : i32
    %c0_i32_1 = arith.constant 0 : i32
    return %c0_i32, %c0_i32_0 : i32, i32
  }
  func.func @transform_3(%arg0: i32) -> (i32, i32, i32) {
    %c0_i32 = arith.constant 0 : i32
    %c0_i32_0 = arith.constant 0 : i32
    %c0_i32_1 = arith.constant 0 : i32
    return %arg0, %c0_i32, %c0_i32_0 : i32, i32, i32
  }
  func.func @transform_4(%arg0: i32) -> (i32, i32, i32) {
    %c0_i32 = arith.constant 0 : i32
    %c0_i32_0 = arith.constant 0 : i32
    %c0_i32_1 = arith.constant 0 : i32
    return %arg0, %c0_i32, %c0_i32_0 : i32, i32, i32
  }
}

module attributes {stable_mosaic.version = 11 : i64} {
  func.func @_bn_relu_conv_stats_kernel(%arg0: i32, %arg1: memref<1x8x256xbf16, #tpu.memory_space<vmem>>, %arg2: memref<8x1xf32, #tpu.memory_space<vmem>>, %arg3: memref<8x1xf32, #tpu.memory_space<vmem>>, %arg4: memref<8x72xbf16, #tpu.memory_space<vmem>>, %arg5: memref<9x256xf32, #tpu.memory_space<vmem>>, %arg6: memref<1x8x256xbf16, #tpu.memory_space<vmem>>, %arg7: memref<1x8x2xf32, #tpu.memory_space<vmem>>) attributes {dimension_semantics = [#tpu.dimension_semantics<parallel>], iteration_bounds = array<i64: 2>, scalar_prefetch = 0 : i64, scratch_operands = 0 : i64, tpu.core_type = #tpu.core_type<tc>, window_params = [{transform_indices = @transform_0, window_bounds = array<i64: 1, 8, 256>}, {pipeline_mode = #tpu.pipeline_mode<synchronous>, transform_indices = @transform_1, window_bounds = array<i64: 8, 1>}, {pipeline_mode = #tpu.pipeline_mode<synchronous>, transform_indices = @transform_2, window_bounds = array<i64: 8, 1>}, {pipeline_mode = #tpu.pipeline_mode<synchronous>, transform_indices = @transform_3, window_bounds = array<i64: 8, 72>}, {pipeline_mode = #tpu.pipeline_mode<synchronous>, transform_indices = @transform_4, window_bounds = array<i64: 9, 256>}, {transform_indices = @transform_5, window_bounds = array<i64: 1, 8, 256>}, {transform_indices = @transform_6, window_bounds = array<i64: 1, 8, 2>}]} {
    %c0 = arith.constant 0 : index
    %c0_0 = arith.constant 0 : index
    %c0_1 = arith.constant 0 : index
    %0 = vector.load %arg1[%c0, %c0_0, %c0_1] : memref<1x8x256xbf16, #tpu.memory_space<vmem>>, vector<1x8x256xbf16>
    %1 = vector.shape_cast %0 : vector<1x8x256xbf16> to vector<8x256xbf16>
    %2 = arith.extf %1 : vector<8x256xbf16> to vector<8x256xf32>
    %c0_2 = arith.constant 0 : index
    %c0_3 = arith.constant 0 : index
    %3 = vector.load %arg2[%c0_2, %c0_3] : memref<8x1xf32, #tpu.memory_space<vmem>>, vector<8x1xf32>
    %4 = vector.broadcast %3 : vector<8x1xf32> to vector<8x256xf32>
    %5 = arith.mulf %2, %4 : vector<8x256xf32>
    %c0_4 = arith.constant 0 : index
    %c0_5 = arith.constant 0 : index
    %6 = vector.load %arg3[%c0_4, %c0_5] : memref<8x1xf32, #tpu.memory_space<vmem>>, vector<8x1xf32>
    %7 = vector.broadcast %6 : vector<8x1xf32> to vector<8x256xf32>
    %8 = arith.addf %5, %7 : vector<8x256xf32>
    %cst = arith.constant 0.000000e+00 : f32
    %9 = vector.broadcast %cst : f32 to vector<8x256xf32>
    %10 = arith.maximumf %8, %9 : vector<8x256xf32>
    %11 = vector.extract_strided_slice %10 {offsets = [0, 239], sizes = [8, 17], strides = [1, 1]} : vector<8x256xf32> to vector<8x17xf32>
    %12 = vector.extract_strided_slice %10 {offsets = [0, 0], sizes = [8, 239], strides = [1, 1]} : vector<8x256xf32> to vector<8x239xf32>
    %13 = tpu.concatenate %11, %12 in 1 : vector<8x17xf32>, vector<8x239xf32> -> vector<8x256xf32>
    %c0_6 = arith.constant 0 : index
    %c0_7 = arith.constant 0 : index
    %14 = vector.load %arg5[%c0_6, %c0_7] : memref<9x256xf32, #tpu.memory_space<vmem>>, vector<1x256xf32>
    %15 = vector.broadcast %14 : vector<1x256xf32> to vector<8x256xf32>
    %16 = arith.mulf %13, %15 : vector<8x256xf32>
    %17 = vector.extract_strided_slice %10 {offsets = [0, 240], sizes = [8, 16], strides = [1, 1]} : vector<8x256xf32> to vector<8x16xf32>
    %18 = vector.extract_strided_slice %10 {offsets = [0, 0], sizes = [8, 240], strides = [1, 1]} : vector<8x256xf32> to vector<8x240xf32>
    %19 = tpu.concatenate %17, %18 in 1 : vector<8x16xf32>, vector<8x240xf32> -> vector<8x256xf32>
    %c1 = arith.constant 1 : index
    %c0_8 = arith.constant 0 : index
    %20 = vector.load %arg5[%c1, %c0_8] : memref<9x256xf32, #tpu.memory_space<vmem>>, vector<1x256xf32>
    %21 = vector.broadcast %20 : vector<1x256xf32> to vector<8x256xf32>
    %22 = arith.mulf %19, %21 : vector<8x256xf32>
    %23 = vector.extract_strided_slice %10 {offsets = [0, 241], sizes = [8, 15], strides = [1, 1]} : vector<8x256xf32> to vector<8x15xf32>
    %24 = vector.extract_strided_slice %10 {offsets = [0, 0], sizes = [8, 241], strides = [1, 1]} : vector<8x256xf32> to vector<8x241xf32>
    %25 = tpu.concatenate %23, %24 in 1 : vector<8x15xf32>, vector<8x241xf32> -> vector<8x256xf32>
    %c2 = arith.constant 2 : index
    %c0_9 = arith.constant 0 : index
    %26 = vector.load %arg5[%c2, %c0_9] : memref<9x256xf32, #tpu.memory_space<vmem>>, vector<1x256xf32>
    %27 = vector.broadcast %26 : vector<1x256xf32> to vector<8x256xf32>
    %28 = arith.mulf %25, %27 : vector<8x256xf32>
    %29 = vector.extract_strided_slice %10 {offsets = [0, 255], sizes = [8, 1], strides = [1, 1]} : vector<8x256xf32> to vector<8x1xf32>
    %30 = vector.extract_strided_slice %10 {offsets = [0, 0], sizes = [8, 255], strides = [1, 1]} : vector<8x256xf32> to vector<8x255xf32>
    %31 = tpu.concatenate %29, %30 in 1 : vector<8x1xf32>, vector<8x255xf32> -> vector<8x256xf32>
    %c3 = arith.constant 3 : index
    %c0_10 = arith.constant 0 : index
    %32 = vector.load %arg5[%c3, %c0_10] : memref<9x256xf32, #tpu.memory_space<vmem>>, vector<1x256xf32>
    %33 = vector.broadcast %32 : vector<1x256xf32> to vector<8x256xf32>
    %34 = arith.mulf %31, %33 : vector<8x256xf32>
    %35 = vector.extract_strided_slice %10 {offsets = [0, 1], sizes = [8, 255], strides = [1, 1]} : vector<8x256xf32> to vector<8x255xf32>
    %36 = vector.extract_strided_slice %10 {offsets = [0, 0], sizes = [8, 1], strides = [1, 1]} : vector<8x256xf32> to vector<8x1xf32>
    %37 = tpu.concatenate %35, %36 in 1 : vector<8x255xf32>, vector<8x1xf32> -> vector<8x256xf32>
    %c5 = arith.constant 5 : index
    %c0_11 = arith.constant 0 : index
    %38 = vector.load %arg5[%c5, %c0_11] : memref<9x256xf32, #tpu.memory_space<vmem>>, vector<1x256xf32>
    %39 = vector.broadcast %38 : vector<1x256xf32> to vector<8x256xf32>
    %40 = arith.mulf %37, %39 : vector<8x256xf32>
    %41 = vector.extract_strided_slice %10 {offsets = [0, 15], sizes = [8, 241], strides = [1, 1]} : vector<8x256xf32> to vector<8x241xf32>
    %42 = vector.extract_strided_slice %10 {offsets = [0, 0], sizes = [8, 15], strides = [1, 1]} : vector<8x256xf32> to vector<8x15xf32>
    %43 = tpu.concatenate %41, %42 in 1 : vector<8x241xf32>, vector<8x15xf32> -> vector<8x256xf32>
    %c6 = arith.constant 6 : index
    %c0_12 = arith.constant 0 : index
    %44 = vector.load %arg5[%c6, %c0_12] : memref<9x256xf32, #tpu.memory_space<vmem>>, vector<1x256xf32>
    %45 = vector.broadcast %44 : vector<1x256xf32> to vector<8x256xf32>
    %46 = arith.mulf %43, %45 : vector<8x256xf32>
    %47 = vector.extract_strided_slice %10 {offsets = [0, 16], sizes = [8, 240], strides = [1, 1]} : vector<8x256xf32> to vector<8x240xf32>
    %48 = vector.extract_strided_slice %10 {offsets = [0, 0], sizes = [8, 16], strides = [1, 1]} : vector<8x256xf32> to vector<8x16xf32>
    %49 = tpu.concatenate %47, %48 in 1 : vector<8x240xf32>, vector<8x16xf32> -> vector<8x256xf32>
    %c7 = arith.constant 7 : index
    %c0_13 = arith.constant 0 : index
    %50 = vector.load %arg5[%c7, %c0_13] : memref<9x256xf32, #tpu.memory_space<vmem>>, vector<1x256xf32>
    %51 = vector.broadcast %50 : vector<1x256xf32> to vector<8x256xf32>
    %52 = arith.mulf %49, %51 : vector<8x256xf32>
    %53 = vector.extract_strided_slice %10 {offsets = [0, 17], sizes = [8, 239], strides = [1, 1]} : vector<8x256xf32> to vector<8x239xf32>
    %54 = vector.extract_strided_slice %10 {offsets = [0, 0], sizes = [8, 17], strides = [1, 1]} : vector<8x256xf32> to vector<8x17xf32>
    %55 = tpu.concatenate %53, %54 in 1 : vector<8x239xf32>, vector<8x17xf32> -> vector<8x256xf32>
    %c8 = arith.constant 8 : index
    %c0_14 = arith.constant 0 : index
    %56 = vector.load %arg5[%c8, %c0_14] : memref<9x256xf32, #tpu.memory_space<vmem>>, vector<1x256xf32>
    %57 = vector.broadcast %56 : vector<1x256xf32> to vector<8x256xf32>
    %58 = arith.mulf %55, %57 : vector<8x256xf32>
    %59 = tpu.concatenate %16, %22, %28, %34, %10, %40, %46, %52, %58 in 0 : vector<8x256xf32>, vector<8x256xf32>, vector<8x256xf32>, vector<8x256xf32>, vector<8x256xf32>, vector<8x256xf32>, vector<8x256xf32>, vector<8x256xf32>, vector<8x256xf32> -> vector<72x256xf32>
    %60 = arith.truncf %59 : vector<72x256xf32> to vector<72x256xbf16>
    %c0_15 = arith.constant 0 : index
    %c0_16 = arith.constant 0 : index
    %61 = vector.load %arg4[%c0_15, %c0_16] : memref<8x72xbf16, #tpu.memory_space<vmem>>, vector<8x72xbf16>
    %cst_17 = arith.constant dense<0.000000e+00> : vector<8x256xf32>
    %62 = tpu.matmul %61, %60, %cst_17 {dimension_numbers = #tpu.dot_dimension_numbers<[1], [0], [0], [1], [0, 0, 1, 1], [], []>} : vector<8x72xbf16>, vector<72x256xbf16>, vector<8x256xf32> -> vector<8x256xf32>
    %63 = arith.truncf %62 : vector<8x256xf32> to vector<8x256xbf16>
    %c0_18 = arith.constant 0 : index
    %c0_19 = arith.constant 0 : index
    %c0_20 = arith.constant 0 : index
    %64 = vector.load %arg6[%c0_18, %c0_19, %c0_20] : memref<1x8x256xbf16, #tpu.memory_space<vmem>>, vector<1x8x256xbf16>
    %65 = vector.shape_cast %64 : vector<1x8x256xbf16> to vector<8x256xbf16>
    %66 = vector.shape_cast %63 : vector<8x256xbf16> to vector<1x8x256xbf16>
    tpu.vector_store %arg6[%c0_18, %c0_19, %c0_20], %66 {strides = array<i32>} : memref<1x8x256xbf16, #tpu.memory_space<vmem>>, vector<1x8x256xbf16>,
    %cst_21 = arith.constant dense<0.000000e+00> : vector<8xf32>
    %67 = vector.multi_reduction <add>, %62, %cst_21 [1] : vector<8x256xf32> to vector<8xf32>
    %68 = vector.shape_cast %67 : vector<8xf32> to vector<8x1xf32>
    %cst_22 = arith.constant 3.906250e-03 : f32
    %69 = vector.broadcast %cst_22 : f32 to vector<8x1xf32>
    %70 = arith.mulf %68, %69 : vector<8x1xf32>
    %71 = vector.broadcast %70 : vector<8x1xf32> to vector<8x256xf32>
    %72 = arith.subf %62, %71 : vector<8x256xf32>
    %73 = arith.mulf %72, %72 : vector<8x256xf32>
    %cst_23 = arith.constant dense<0.000000e+00> : vector<8xf32>
    %74 = vector.multi_reduction <add>, %73, %cst_23 [1] : vector<8x256xf32> to vector<8xf32>
    %75 = vector.shape_cast %74 : vector<8xf32> to vector<8x1xf32>
    %76 = tpu.concatenate %70, %75 in 1 : vector<8x1xf32>, vector<8x1xf32> -> vector<8x2xf32>
    %c0_24 = arith.constant 0 : index
    %c0_25 = arith.constant 0 : index
    %c0_26 = arith.constant 0 : index
    %77 = vector.load %arg7[%c0_24, %c0_25, %c0_26] : memref<1x8x2xf32, #tpu.memory_space<vmem>>, vector<1x8x2xf32>
    %78 = vector.shape_cast %77 : vector<1x8x2xf32> to vector<8x2xf32>
    %79 = vector.shape_cast %76 : vector<8x2xf32> to vector<1x8x2xf32>
    tpu.vector_store %arg7[%c0_24, %c0_25, %c0_26], %79 {strides = array<i32>} : memref<1x8x2xf32, #tpu.memory_space<vmem>>, vector<1x8x2xf32>,
    return
  }
  func.func @transform_0(%arg0: i32) -> (i32, i32, i32) {
    %c0_i32 = arith.constant 0 : i32
    %c0_i32_0 = arith.constant 0 : i32
    %c0_i32_1 = arith.constant 0 : i32
    return %arg0, %c0_i32, %c0_i32_0 : i32, i32, i32
  }
  func.func @transform_1(%arg0: i32) -> (i32, i32) {
    %c0_i32 = arith.constant 0 : i32
    %c0_i32_0 = arith.constant 0 : i32
    %c0_i32_1 = arith.constant 0 : i32
    return %c0_i32, %c0_i32_0 : i32, i32
  }
  func.func @transform_2(%arg0: i32) -> (i32, i32) {
    %c0_i32 = arith.constant 0 : i32
    %c0_i32_0 = arith.constant 0 : i32
    %c0_i32_1 = arith.constant 0 : i32
    return %c0_i32, %c0_i32_0 : i32, i32
  }
  func.func @transform_3(%arg0: i32) -> (i32, i32) {
    %c0_i32 = arith.constant 0 : i32
    %c0_i32_0 = arith.constant 0 : i32
    %c0_i32_1 = arith.constant 0 : i32
    return %c0_i32, %c0_i32_0 : i32, i32
  }
  func.func @transform_4(%arg0: i32) -> (i32, i32) {
    %c0_i32 = arith.constant 0 : i32
    %c0_i32_0 = arith.constant 0 : i32
    %c0_i32_1 = arith.constant 0 : i32
    return %c0_i32, %c0_i32_0 : i32, i32
  }
  func.func @transform_5(%arg0: i32) -> (i32, i32, i32) {
    %c0_i32 = arith.constant 0 : i32
    %c0_i32_0 = arith.constant 0 : i32
    %c0_i32_1 = arith.constant 0 : i32
    return %arg0, %c0_i32, %c0_i32_0 : i32, i32, i32
  }
  func.func @transform_6(%arg0: i32) -> (i32, i32, i32) {
    %c0_i32 = arith.constant 0 : i32
    %c0_i32_0 = arith.constant 0 : i32
    %c0_i32_1 = arith.constant 0 : i32
    return %arg0, %c0_i32, %c0_i32_0 : i32, i32, i32
  }
}

</mosaic_0001>

<llo_original>
// kernel: conv_block_forward.5
$region0: #{conv_block_forward.5}
  #allocation0 [shape = 'u32[]', space=smem, size = 0x4, offset = 0x4, fixed_abs, tag = 'smem constant byte address 0x4 - core index']
  #allocation1 [shape = 'u32[144,128]{1,0:T(1,128)}', space=vmem, size = 0x12000, scoped, tag = 'internal scratch']
  %s0 = inlined_call_operand.hbm [shape: bf16[2,8,256], index: 0, kind: input, shape index: {}]
  %s1 = inlined_call_operand.hbm [shape: f32[8,1], index: 1, kind: input, shape index: {}]
  %s2 = inlined_call_operand.hbm [shape: f32[8,1], index: 2, kind: input, shape index: {}]
  %s3 = inlined_call_operand.hbm [shape: f32[2,8,256], index: 3, kind: output, shape index: {}]
  %s4 = sld [smem:[#allocation0]]
  $region57: #{conv_block_forward.5} parent=0
    _
  %s6 = ssub.s32 1, %s4
  %s7 = scalar_select 0, %s6, %s4
  $region1: #{conv_block_forward.5} parent=0
    #allocation2 [shape = 'u8[8192]{0}', space=vmem, size = 0x2000, scoped, tag = 'input window, operand 0']
    #allocation3 [shape = 's32[2]{0}', space=sflag, size = 0x8, scoped, tag = 'scoped memory for conv_block_forward.5']
    #allocation4 [shape = 's32[2]{0}', space=sflag, size = 0x8, scoped, tag = 'scoped memory for conv_block_forward.5']
    #allocation5 [shape = 'u8[4096]{0}', space=vmem, size = 0x1000, scoped, tag = 'input window, operand 1, single buffered']
    #allocation6 [shape = 's32[1]{0}', space=sflag, size = 0x4, scoped, tag = 'scoped memory for conv_block_forward.5']
    #allocation7 [shape = 'u8[4096]{0}', space=vmem, size = 0x1000, scoped, tag = 'input window, operand 2, single buffered']
    #allocation8 [shape = 'u8[16384]{0}', space=vmem, size = 0x4000, scoped, tag = 'output window, operand 0']
    %8 = vsyncpa [#allocation3], 0
    %s9 = scalar_lea.sflag [#allocation3], 1
    %10 = vsyncpa %s9, 0
    %11 = vsyncpa [#allocation6], 0
    %12 = vsyncpa [#allocation4], 0
    %s13 = scalar_lea.sflag [#allocation4], 1
    %14 = vsyncpa %s13, 0
    loop: start=0, step=1, limit=4
    $region2: #{conv_block_forward.5} parent=1 // loop_pre_header
      _
    $region3: #{conv_block_forward.5} parent=1 // loop_header
      %s16 = sphi 0, %s20
      %p17 = scmp.ge.s32.totalorder %s16, 4
      %s26 = sphi 0, %s28
      %s29 = sphi 0, %s26
      %s30 = sphi 0, %s29
      %s46 = sphi 0, %s30
      %s50 = sphi 0, %s50
      %s52 = sphi 0, %s50
      %s53 = sphi 0, %s52
      %s67 = sphi 0, %s53
      %s71 = sphi 0, %s71
      %s73 = sphi 0, %s71
      %s74 = sphi 0, %s73
      %s88 = sphi 0, %s74
      %s94 = sphi 0, %s96
      %s97 = sphi 0, %s94
      %s98 = sphi 0, %s97
      %s114 = sphi 0, %s98
    $region4: #{conv_block_forward.5} parent=1 // loop_header_branch
      %19 = sbr.rel (%p17) target = $region8
    $region5: #{conv_block_forward.5} parent=1 // loop_body
      %s21 = ssub.s32 %s16, 1
      %s22 = ssub.s32 %s16, 2
      %s23 = sadd.s32 %s16, 1
      %s24 = ssub.s32 %s16, %s23
      %p25 = scmp.eq.s32.totalorder %s24, 0
      %s27 = sadd.s32 %s26, 1
      %s28 = scalar_select %p25, %s26, %s27
      %p31 = pneg %p25
      %p32 = scmp.eq.s32.totalorder %s16, 1
      %p33 = por %p31, %p32
      %p34 = scmp.ne.s32.totalorder %s26, %s29
      %p35 = scmp.eq.s32.totalorder %s16, 0
      %p36 = por %p34, %p35
      %p37 = scmp.ne.s32.totalorder %s26, %s29
      %p38 = scmp.eq.s32.totalorder %s21, 1
      %p39 = por %p37, %p38
      %p40 = scmp.ne.s32.totalorder %s29, %s30
      %p41 = scmp.eq.s32.totalorder %s21, 0
      %p42 = por %p40, %p41
      %p43 = scmp.ne.s32.totalorder %s29, %s30
      %p44 = scmp.eq.s32.totalorder %s22, 1
      %p45 = por %p43, %p44
      %p47 = scmp.ne.s32.totalorder %s30, %s46
      %p48 = scmp.eq.s32.totalorder %s22, 0
      %p49 = por %p47, %p48
      %s51 = sadd.s32 %s50, 1
      %p54 = scmp.eq.s32.totalorder %s16, 1
      %p55 = scmp.ne.s32.totalorder %s50, %s52
      %p56 = scmp.eq.s32.totalorder %s16, 0
      %p57 = por %p55, %p56
      %p58 = scmp.ne.s32.totalorder %s50, %s52
      %p59 = scmp.eq.s32.totalorder %s21, 1
      %p60 = por %p58, %p59
      %p61 = scmp.ne.s32.totalorder %s52, %s53
      %p62 = scmp.eq.s32.totalorder %s21, 0
      %p63 = por %p61, %p62
      %p64 = scmp.ne.s32.totalorder %s52, %s53
      %p65 = scmp.eq.s32.totalorder %s22, 1
      %p66 = por %p64, %p65
      %p68 = scmp.ne.s32.totalorder %s53, %s67
      %p69 = scmp.eq.s32.totalorder %s22, 0
      %p70 = por %p68, %p69
      %s72 = sadd.s32 %s71, 1
      %p75 = scmp.eq.s32.totalorder %s16, 1
      %p76 = scmp.ne.s32.totalorder %s71, %s73
      %p77 = scmp.eq.s32.totalorder %s16, 0
      %p78 = por %p76, %p77
      %p79 = scmp.ne.s32.totalorder %s71, %s73
      %p80 = scmp.eq.s32.totalorder %s21, 1
      %p81 = por %p79, %p80
      %p82 = scmp.ne.s32.totalorder %s73, %s74
      %p83 = scmp.eq.s32.totalorder %s21, 0
      %p84 = por %p82, %p83
      %p85 = scmp.ne.s32.totalorder %s73, %s74
      %p86 = scmp.eq.s32.totalorder %s22, 1
      %p87 = por %p85, %p86
      %p89 = scmp.ne.s32.totalorder %s74, %s88
      %p90 = scmp.eq.s32.totalorder %s22, 0
      %p91 = por %p89, %p90
      %s92 = ssub.s32 %s16, %s23
      %p93 = scmp.eq.s32.totalorder %s92, 0
      %s95 = sadd.s32 %s94, 1
      %s96 = scalar_select %p93, %s94, %s95
      %p99 = pneg %p93
      %p100 = scmp.eq.s32.totalorder %s16, 1
      %p101 = por %p99, %p100
      %p102 = scmp.ne.s32.totalorder %s94, %s97
      %p103 = scmp.eq.s32.totalorder %s16, 0
      %p104 = por %p102, %p103
      %p105 = scmp.ne.s32.totalorder %s94, %s97
      %p106 = scmp.eq.s32.totalorder %s21, 1
      %p107 = por %p105, %p106
      %p108 = scmp.ne.s32.totalorder %s97, %s98
      %p109 = scmp.eq.s32.totalorder %s21, 0
      %p110 = por %p108, %p109
      %p111 = scmp.ne.s32.totalorder %s97, %s98
      %p112 = scmp.eq.s32.totalorder %s22, 1
      %p113 = por %p111, %p112
      %p115 = scmp.ne.s32.totalorder %s98, %s114
      %p116 = scmp.eq.s32.totalorder %s22, 0
      %p117 = por %p115, %p116
      %p118 = scmp.le.s32.totalorder 1, %s16
      %p119 = scmp.lt.s32.totalorder %s16, 3
      %p120 = pnand %p118, %p119
      %p121 = pneg %p120
      // Predicated region
      $region9: #{conv_block_forward.5} parent=5 // pred_check
        _
      $region10: #{conv_block_forward.5} parent=5 // pred_check_branch
        %123 = sbr.rel (%p120) target = $region12
      $region11: #{conv_block_forward.5} parent=5 // pred_region
        %s124 = ssub.s32 %s16, 1
        // Predicated region
        $region13: #{conv_block_forward.5} parent=11 // pred_check
          %p125 = pneg %p63
        $region14: #{conv_block_forward.5} parent=11 // pred_check_branch
          %127 = sbr.rel (%p125) target = $region16
        $region15: #{conv_block_forward.5} parent=11 // pred_region
          %s129 = ssub.s32 128, 128
          %130 = vsyncadd [#allocation6], %s129
          %s132 = sshll.u32 [#allocation5], 4
          %s133 = int_to_ptr.vmem [resolvable:$true] %s132
          %135 = dma.hbm_to_vmem [thread:$0]  %s1, 128, %s133, [#allocation6]
        $region16: #{conv_block_forward.5} parent=11 // pred_fallthru
          _
        // Predicated region
        $region17: #{conv_block_forward.5} parent=11 // pred_check
          %p136 = pneg %p84
        $region18: #{conv_block_forward.5} parent=11 // pred_check_branch
          %138 = sbr.rel (%p136) target = $region20
        $region19: #{conv_block_forward.5} parent=11 // pred_region
          %s140 = ssub.s32 128, 128
          %141 = vsyncadd [#allocation6], %s140
          %s143 = sshll.u32 [#allocation7], 4
          %s144 = int_to_ptr.vmem [resolvable:$true] %s143
          %146 = dma.hbm_to_vmem [thread:$0]  %s2, 128, %s144, [#allocation6]
        $region20: #{conv_block_forward.5} parent=11 // pred_fallthru
          _
      $region12: #{conv_block_forward.5} parent=5 // pred_fallthru
        _
      %p147 = scmp.lt.s32.totalorder %s16, 2
      // Predicated region
      $region21: #{conv_block_forward.5} parent=5 // pred_check
        %p148 = pneg %p147
      $region22: #{conv_block_forward.5} parent=5 // pred_check_branch
        %150 = sbr.rel (%p148) target = $region24
      $region23: #{conv_block_forward.5} parent=5 // pred_region
        // Predicated region
        $region25: #{conv_block_forward.5} parent=23 // pred_check
          %p151 = pneg %p36
        $region26: #{conv_block_forward.5} parent=23 // pred_check_branch
          %153 = sbr.rel (%p151) target = $region28
        $region27: #{conv_block_forward.5} parent=23 // pred_region
          %s154 = sand.u32 %s26, 1
          %s155 = scalar_lea.sflag [#allocation3], %s154
          %s156 = sand.u32 %s26, 1
          %s157 = smul.addr %s156, 8
          %s158 = scalar_lea.vmem [#allocation2], %s157
          %s160 = ssub.s32 128, 128
          %161 = vsyncadd %s155, %s160
          %s162 = smul.addr %s16, 2
          %s163 = smul.addr %s162, 64
          %s164 = scalar_lea.hbm %s0, %s163
          %s166 = sshll.u32 %s158, 4
          %s167 = int_to_ptr.vmem [resolvable:$true] %s166
          %169 = dma.hbm_to_vmem [thread:$0]  %s164, 128, %s167, %s155
        $region28: #{conv_block_forward.5} parent=23 // pred_fallthru
          _
      $region24: #{conv_block_forward.5} parent=5 // pred_fallthru
        _
      %p170 = scmp.le.s32.totalorder 1, %s16
      %p171 = scmp.lt.s32.totalorder %s16, 3
      %p172 = pnand %p170, %p171
      %p173 = pneg %p172
      // Predicated region
      $region29: #{conv_block_forward.5} parent=5 // pred_check
        _
      $region30: #{conv_block_forward.5} parent=5 // pred_check_branch
        %175 = sbr.rel (%p172) target = $region32
      $region31: #{conv_block_forward.5} parent=5 // pred_region
        %s176 = ssub.s32 %s16, 1
        %s177 = sand.u32 %s29, 1
        %s178 = scalar_lea.sflag [#allocation3], %s177
        %s179 = sand.u32 %s29, 1
        %s180 = smul.addr %s179, 8
        %s181 = scalar_lea.vmem [#allocation2], %s180
        // Predicated region
        $region33: #{conv_block_forward.5} parent=31 // pred_check
          %p182 = pneg %p42
        $region34: #{conv_block_forward.5} parent=31 // pred_check_branch
          %184 = sbr.rel (%p182) target = $region36
        $region35: #{conv_block_forward.5} parent=31 // pred_region
          %185 = dma.done %s178, 128
        $region36: #{conv_block_forward.5} parent=31 // pred_fallthru
          _
        // Predicated region
        $region37: #{conv_block_forward.5} parent=31 // pred_check
          %p186 = pneg %p63
        $region38: #{conv_block_forward.5} parent=31 // pred_check_branch
          %188 = sbr.rel (%p186) target = $region40
        $region39: #{conv_block_forward.5} parent=31 // pred_region
          %189 = dma.done [#allocation6], 128
        $region40: #{conv_block_forward.5} parent=31 // pred_fallthru
          _
        // Predicated region
        $region41: #{conv_block_forward.5} parent=31 // pred_check
          %p190 = pneg %p84
        $region42: #{conv_block_forward.5} parent=31 // pred_check_branch
          %192 = sbr.rel (%p190) target = $region44
        $region43: #{conv_block_forward.5} parent=31 // pred_region
          %193 = dma.done [#allocation6], 128
        $region44: #{conv_block_forward.5} parent=31 // pred_fallthru
          _
        %s194 = sand.u32 %s29, 1
        %s195 = scalar_lea.sflag [#allocation3], %s194
        %s196 = sand.u32 %s29, 1
        %s197 = smul.addr %s196, 8
        %s198 = scalar_lea.vmem [#allocation2], %s197
        %p199 = pneg %p42
        %p200 = pneg %p39
        %p201 = pneg %p63
        %p202 = pneg %p60
        %p203 = pneg %p84
        %p204 = pneg %p81
        %p205 = pneg %p110
        %p206 = pneg %p107
        %s207 = sand.u32 %s97, 1
        %s208 = scalar_lea.sflag [#allocation4], %s207
        %s209 = sand.u32 %s97, 1
        %s210 = smul.addr %s209, 16
        %s211 = scalar_lea.vmem [#allocation8], %s210
        %v212 = vld [vmem:[%s181] sm:$0xff]
        %v213 = vunpack.c.l.bf16 %v212
        %v214 = vunpack.c.h.bf16 %v212
        %v215 = vld [vmem:[#allocation5] sm:$0xff]
        %217 = vset.pattern.permute.xlu0 0
        %218 = vperm.xlu0 %217, %v215
        %v219 = vpop.permute.xlu0 %218
        %v221 = vmul.f32 %v213, %v219
        %v222 = vmul.f32 %v214, %v219
        %v223 = vld [vmem:[#allocation7] sm:$0xff]
        %225 = vset.pattern.permute.xlu0 0
        %226 = vperm.xlu0 %225, %v223
        %v227 = vpop.permute.xlu0 %226
        %v229 = vadd.f32 %v221, %v227
        %v230 = vadd.f32 %v222, %v227
        %v231 = vmax.f32 %v229, 0.0
        %v232 = vmax.f32 %v230, 0.0
        %233 = vst [vmem:[%s211] sm:$0xff] %v231
        %234 = vst [vmem:[%s211 + $0x8] sm:$0xff] %v232
        %s235 = sand.u32 %s97, 1
        %s236 = scalar_lea.sflag [#allocation4], %s235
        %s237 = sand.u32 %s97, 1
        %s238 = smul.addr %s237, 16
        %s239 = scalar_lea.vmem [#allocation8], %s238
        // Predicated region
        $region45: #{conv_block_forward.5} parent=31 // pred_check
          %p240 = pneg %p107
        $region46: #{conv_block_forward.5} parent=31 // pred_check_branch
          %242 = sbr.rel (%p240) target = $region48
        $region47: #{conv_block_forward.5} parent=31 // pred_region
          %s244 = ssub.s32 256, 256
          %245 = vsyncadd %s236, %s244
          %s246 = smul.addr %s21, 2
          %s247 = smul.addr %s246, 128
          %s248 = scalar_lea.hbm %s3, %s247
          %s250 = sshll.u32 %s239, 4
          %s251 = int_to_ptr.vmem [resolvable:$true] %s250
          %253 = dma.vmem_to_hbm [thread:$0]  %s251, 256, %s248, %s236
        $region48: #{conv_block_forward.5} parent=31 // pred_fallthru
          _
      $region32: #{conv_block_forward.5} parent=5 // pred_fallthru
        _
      %p254 = scmp.le.s32.totalorder 2, %s16
      // Predicated region
      $region49: #{conv_block_forward.5} parent=5 // pred_check
        %p255 = pneg %p254
      $region50: #{conv_block_forward.5} parent=5 // pred_check_branch
        %257 = sbr.rel (%p255) target = $region52
      $region51: #{conv_block_forward.5} parent=5 // pred_region
        %s258 = ssub.s32 %s16, 2
        // Predicated region
        $region53: #{conv_block_forward.5} parent=51 // pred_check
          %p259 = pneg %p113
        $region54: #{conv_block_forward.5} parent=51 // pred_check_branch
          %261 = sbr.rel (%p259) target = $region56
        $region55: #{conv_block_forward.5} parent=51 // pred_region
          %s262 = sand.u32 %s98, 1
          %s263 = scalar_lea.sflag [#allocation4], %s262
          %s264 = sand.u32 %s98, 1
          %s265 = smul.addr %s264, 16
          %s266 = scalar_lea.vmem [#allocation8], %s265
          %267 = dma.done %s263, 256
        $region56: #{conv_block_forward.5} parent=51 // pred_fallthru
          _
      $region52: #{conv_block_forward.5} parent=5 // pred_fallthru
        _
    $region6: #{conv_block_forward.5} parent=1 // loop_footer
      %s20 = sadd.s32 1, %s16
    $region7: #{conv_block_forward.5} parent=1 // loop_footer_branch
      %15 = sbr.rel target = $region3
    $region8: #{conv_block_forward.5} parent=1 // loop_exit
      _
    %268 = vsyncpa [#allocation3], 1
    %s269 = scalar_lea.sflag [#allocation3], 1
    %270 = vsyncpa %s269, 1
    %271 = vsyncpa [#allocation6], 1
    %272 = vsyncpa [#allocation4], 1
    %s273 = scalar_lea.sflag [#allocation4], 1
    %274 = vsyncpa %s273, 1

// kernel: conv_block_forward.3
$region0: #{conv_block_forward.3}
  #allocation0 [shape = 'u32[]', space=smem, size = 0x4, offset = 0x4, fixed_abs, tag = 'smem constant byte address 0x4 - core index']
  #allocation1 [shape = 'u32[144,128]{1,0:T(1,128)}', space=vmem, size = 0x12000, scoped, tag = 'internal scratch']
  %s0 = inlined_call_operand.hbm [shape: f32[2,4,256], index: 0, kind: input, shape index: {}]
  %s1 = inlined_call_operand.hbm [shape: bf16[8,36], index: 1, kind: input, shape index: {}]
  %s2 = inlined_call_operand.hbm [shape: f32[9,256], index: 2, kind: input, shape index: {}]
  %s3 = inlined_call_operand.hbm [shape: bf16[2,8,256], index: 3, kind: output, shape index: {0}]
  %s4 = inlined_call_operand.hbm [shape: f32[2,8,2], index: 4, kind: output, shape index: {1}]
  %5 = xla_tuple %s3, %s4
  %s6 = sld [smem:[#allocation0]]
  $region65: #{conv_block_forward.3} parent=0
    _
  %s8 = ssub.s32 1, %s6
  %s9 = scalar_select 0, %s8, %s6
  $region1: #{conv_block_forward.3} parent=0
    #allocation2 [shape = 'u8[8192]{0}', space=vmem, size = 0x2000, scoped, tag = 'input window, operand 0']
    #allocation3 [shape = 's32[2]{0}', space=sflag, size = 0x8, scoped, tag = 'scoped memory for conv_block_forward.3']
    #allocation4 [shape = 's32[2]{0}', space=sflag, size = 0x8, scoped, tag = 'scoped memory for conv_block_forward.3']
    #allocation5 [shape = 'u8[2048]{0}', space=vmem, size = 0x800, scoped, tag = 'input window, operand 1, single buffered']
    #allocation6 [shape = 's32[1]{0}', space=sflag, size = 0x4, scoped, tag = 'scoped memory for conv_block_forward.3']
    #allocation7 [shape = 'u8[16384]{0}', space=vmem, size = 0x4000, scoped, tag = 'input window, operand 2, single buffered']
    #allocation8 [shape = 'u8[8192]{0}', space=vmem, size = 0x2000, scoped, tag = 'output window, operand 0']
    #allocation9 [shape = 'u8[8192]{0}', space=vmem, size = 0x2000, scoped, tag = 'output window, operand 1']
    #allocation10 [shape = 's32[2]{0}', space=sflag, size = 0x8, scoped, tag = 'scoped memory for conv_block_forward.3']
    %10 = vsyncpa [#allocation3], 0
    %s11 = scalar_lea.sflag [#allocation3], 1
    %12 = vsyncpa %s11, 0
    %13 = vsyncpa [#allocation6], 0
    %14 = vsyncpa [#allocation4], 0
    %s15 = scalar_lea.sflag [#allocation4], 1
    %16 = vsyncpa %s15, 0
    %17 = vsyncpa [#allocation10], 0
    %s18 = scalar_lea.sflag [#allocation10], 1
    %19 = vsyncpa %s18, 0
    loop: start=0, step=1, limit=4
    $region2: #{conv_block_forward.3} parent=1 // loop_pre_header
      _
    $region3: #{conv_block_forward.3} parent=1 // loop_header
      %s21 = sphi 0, %s25
      %p22 = scmp.ge.s32.totalorder %s21, 4
      %s31 = sphi 0, %s33
      %s34 = sphi 0, %s31
      %s35 = sphi 0, %s34
      %s51 = sphi 0, %s35
      %s55 = sphi 0, %s55
      %s57 = sphi 0, %s55
      %s58 = sphi 0, %s57
      %s72 = sphi 0, %s58
      %s76 = sphi 0, %s76
      %s78 = sphi 0, %s76
      %s79 = sphi 0, %s78
      %s93 = sphi 0, %s79
      %s99 = sphi 0, %s101
      %s102 = sphi 0, %s99
      %s103 = sphi 0, %s102
      %s119 = sphi 0, %s103
      %s125 = sphi 0, %s127
      %s128 = sphi 0, %s125
      %s129 = sphi 0, %s128
      %s145 = sphi 0, %s129
    $region4: #{conv_block_forward.3} parent=1 // loop_header_branch
      %24 = sbr.rel (%p22) target = $region8
    $region5: #{conv_block_forward.3} parent=1 // loop_body
      %s26 = ssub.s32 %s21, 1
      %s27 = ssub.s32 %s21, 2
      %s28 = sadd.s32 %s21, 1
      %s29 = ssub.s32 %s21, %s28
      %p30 = scmp.eq.s32.totalorder %s29, 0
      %s32 = sadd.s32 %s31, 1
      %s33 = scalar_select %p30, %s31, %s32
      %p36 = pneg %p30
      %p37 = scmp.eq.s32.totalorder %s21, 1
      %p38 = por %p36, %p37
      %p39 = scmp.ne.s32.totalorder %s31, %s34
      %p40 = scmp.eq.s32.totalorder %s21, 0
      %p41 = por %p39, %p40
      %p42 = scmp.ne.s32.totalorder %s31, %s34
      %p43 = scmp.eq.s32.totalorder %s26, 1
      %p44 = por %p42, %p43
      %p45 = scmp.ne.s32.totalorder %s34, %s35
      %p46 = scmp.eq.s32.totalorder %s26, 0
      %p47 = por %p45, %p46
      %p48 = scmp.ne.s32.totalorder %s34, %s35
      %p49 = scmp.eq.s32.totalorder %s27, 1
      %p50 = por %p48, %p49
      %p52 = scmp.ne.s32.totalorder %s35, %s51
      %p53 = scmp.eq.s32.totalorder %s27, 0
      %p54 = por %p52, %p53
      %s56 = sadd.s32 %s55, 1
      %p59 = scmp.eq.s32.totalorder %s21, 1
      %p60 = scmp.ne.s32.totalorder %s55, %s57
      %p61 = scmp.eq.s32.totalorder %s21, 0
      %p62 = por %p60, %p61
      %p63 = scmp.ne.s32.totalorder %s55, %s57
      %p64 = scmp.eq.s32.totalorder %s26, 1
      %p65 = por %p63, %p64
      %p66 = scmp.ne.s32.totalorder %s57, %s58
      %p67 = scmp.eq.s32.totalorder %s26, 0
      %p68 = por %p66, %p67
      %p69 = scmp.ne.s32.totalorder %s57, %s58
      %p70 = scmp.eq.s32.totalorder %s27, 1
      %p71 = por %p69, %p70
      %p73 = scmp.ne.s32.totalorder %s58, %s72
      %p74 = scmp.eq.s32.totalorder %s27, 0
      %p75 = por %p73, %p74
      %s77 = sadd.s32 %s76, 1
      %p80 = scmp.eq.s32.totalorder %s21, 1
      %p81 = scmp.ne.s32.totalorder %s76, %s78
      %p82 = scmp.eq.s32.totalorder %s21, 0
      %p83 = por %p81, %p82
      %p84 = scmp.ne.s32.totalorder %s76, %s78
      %p85 = scmp.eq.s32.totalorder %s26, 1
      %p86 = por %p84, %p85
      %p87 = scmp.ne.s32.totalorder %s78, %s79
      %p88 = scmp.eq.s32.totalorder %s26, 0
      %p89 = por %p87, %p88
      %p90 = scmp.ne.s32.totalorder %s78, %s79
      %p91 = scmp.eq.s32.totalorder %s27, 1
      %p92 = por %p90, %p91
      %p94 = scmp.ne.s32.totalorder %s79, %s93
      %p95 = scmp.eq.s32.totalorder %s27, 0
      %p96 = por %p94, %p95
      %s97 = ssub.s32 %s21, %s28
      %p98 = scmp.eq.s32.totalorder %s97, 0
      %s100 = sadd.s32 %s99, 1
      %s101 = scalar_select %p98, %s99, %s100
      %p104 = pneg %p98
      %p105 = scmp.eq.s32.totalorder %s21, 1
      %p106 = por %p104, %p105
      %p107 = scmp.ne.s32.totalorder %s99, %s102
      %p108 = scmp.eq.s32.totalorder %s21, 0
      %p109 = por %p107, %p108
      %p110 = scmp.ne.s32.totalorder %s99, %s102
      %p111 = scmp.eq.s32.totalorder %s26, 1
      %p112 = por %p110, %p111
      %p113 = scmp.ne.s32.totalorder %s102, %s103
      %p114 = scmp.eq.s32.totalorder %s26, 0
      %p115 = por %p113, %p114
      %p116 = scmp.ne.s32.totalorder %s102, %s103
      %p117 = scmp.eq.s32.totalorder %s27, 1
      %p118 = por %p116, %p117
      %p120 = scmp.ne.s32.totalorder %s103, %s119
      %p121 = scmp.eq.s32.totalorder %s27, 0
      %p122 = por %p120, %p121
      %s123 = ssub.s32 %s21, %s28
      %p124 = scmp.eq.s32.totalorder %s123, 0
      %s126 = sadd.s32 %s125, 1
      %s127 = scalar_select %p124, %s125, %s126
      %p130 = pneg %p124
      %p131 = scmp.eq.s32.totalorder %s21, 1
      %p132 = por %p130, %p131
      %p133 = scmp.ne.s32.totalorder %s125, %s128
      %p134 = scmp.eq.s32.totalorder %s21, 0
      %p135 = por %p133, %p134
      %p136 = scmp.ne.s32.totalorder %s125, %s128
      %p137 = scmp.eq.s32.totalorder %s26, 1
      %p138 = por %p136, %p137
      %p139 = scmp.ne.s32.totalorder %s128, %s129
      %p140 = scmp.eq.s32.totalorder %s26, 0
      %p141 = por %p139, %p140
      %p142 = scmp.ne.s32.totalorder %s128, %s129
      %p143 = scmp.eq.s32.totalorder %s27, 1
      %p144 = por %p142, %p143
      %p146 = scmp.ne.s32.totalorder %s129, %s145
      %p147 = scmp.eq.s32.totalorder %s27, 0
      %p148 = por %p146, %p147
      %p149 = scmp.le.s32.totalorder 1, %s21
      %p150 = scmp.lt.s32.totalorder %s21, 3
      %p151 = pnand %p149, %p150
      %p152 = pneg %p151
      // Predicated region
      $region9: #{conv_block_forward.3} parent=5 // pred_check
        _
      $region10: #{conv_block_forward.3} parent=5 // pred_check_branch
        %154 = sbr.rel (%p151) target = $region12
      $region11: #{conv_block_forward.3} parent=5 // pred_region
        %s155 = ssub.s32 %s21, 1
        // Predicated region
        $region13: #{conv_block_forward.3} parent=11 // pred_check
          %p156 = pneg %p68
        $region14: #{conv_block_forward.3} parent=11 // pred_check_branch
          %158 = sbr.rel (%p156) target = $region16
        $region15: #{conv_block_forward.3} parent=11 // pred_region
          %s160 = ssub.s32 64, 64
          %161 = vsyncadd [#allocation6], %s160
          %s163 = sshll.u32 [#allocation5], 4
          %s164 = int_to_ptr.vmem [resolvable:$true] %s163
          %166 = dma.hbm_to_vmem [thread:$0]  %s1, 64, %s164, [#allocation6]
        $region16: #{conv_block_forward.3} parent=11 // pred_fallthru
          _
        // Predicated region
        $region17: #{conv_block_forward.3} parent=11 // pred_check
          %p167 = pneg %p89
        $region18: #{conv_block_forward.3} parent=11 // pred_check_branch
          %169 = sbr.rel (%p167) target = $region20
        $region19: #{conv_block_forward.3} parent=11 // pred_region
          %s171 = ssub.s32 512, 512
          %172 = vsyncadd [#allocation6], %s171
          %s173 = sshll.u32 [#allocation7], 4
          %s174 = int_to_ptr.vmem [resolvable:$true] %s173
          %179 = dma.hbm_to_vmem [thread:$0]  %s2, 512, %s174, [#allocation6], 256, 256, 16
        $region20: #{conv_block_forward.3} parent=11 // pred_fallthru
          _
      $region12: #{conv_block_forward.3} parent=5 // pred_fallthru
        _
      %p180 = scmp.lt.s32.totalorder %s21, 2
      // Predicated region
      $region21: #{conv_block_forward.3} parent=5 // pred_check
        %p181 = pneg %p180
      $region22: #{conv_block_forward.3} parent=5 // pred_check_branch
        %183 = sbr.rel (%p181) target = $region24
      $region23: #{conv_block_forward.3} parent=5 // pred_region
        // Predicated region
        $region25: #{conv_block_forward.3} parent=23 // pred_check
          %p184 = pneg %p41
        $region26: #{conv_block_forward.3} parent=23 // pred_check_branch
          %186 = sbr.rel (%p184) target = $region28
        $region27: #{conv_block_forward.3} parent=23 // pred_region
          %s187 = sand.u32 %s31, 1
          %s188 = scalar_lea.sflag [#allocation3], %s187
          %s189 = sand.u32 %s31, 1
          %s190 = smul.addr %s189, 8
          %s191 = scalar_lea.vmem [#allocation2], %s190
          %s193 = ssub.s32 128, 128
          %194 = vsyncadd %s188, %s193
          %s195 = smul.addr %s21, 2
          %s196 = smul.addr %s195, 64
          %s197 = scalar_lea.hbm %s0, %s196
          %s199 = sshll.u32 %s191, 4
          %s200 = int_to_ptr.vmem [resolvable:$true] %s199
          %202 = dma.hbm_to_vmem [thread:$0]  %s197, 128, %s200, %s188
        $region28: #{conv_block_forward.3} parent=23 // pred_fallthru
          _
      $region24: #{conv_block_forward.3} parent=5 // pred_fallthru
        _
      %p203 = scmp.le.s32.totalorder 1, %s21
      %p204 = scmp.lt.s32.totalorder %s21, 3
      %p205 = pnand %p203, %p204
      %p206 = pneg %p205
      // Predicated region
      $region29: #{conv_block_forward.3} parent=5 // pred_check
        _
      $region30: #{conv_block_forward.3} parent=5 // pred_check_branch
        %208 = sbr.rel (%p205) target = $region32
      $region31: #{conv_block_forward.3} parent=5 // pred_region
        %s209 = ssub.s32 %s21, 1
        %s210 = sand.u32 %s34, 1
        %s211 = scalar_lea.sflag [#allocation3], %s210
        %s212 = sand.u32 %s34, 1
        %s213 = smul.addr %s212, 8
        %s214 = scalar_lea.vmem [#allocation2], %s213
        // Predicated region
        $region33: #{conv_block_forward.3} parent=31 // pred_check
          %p215 = pneg %p47
        $region34: #{conv_block_forward.3} parent=31 // pred_check_branch
          %217 = sbr.rel (%p215) target = $region36
        $region35: #{conv_block_forward.3} parent=31 // pred_region
          %218 = dma.done %s211, 128
        $region36: #{conv_block_forward.3} parent=31 // pred_fallthru
          _
        // Predicated region
        $region37: #{conv_block_forward.3} parent=31 // pred_check
          %p219 = pneg %p68
        $region38: #{conv_block_forward.3} parent=31 // pred_check_branch
          %221 = sbr.rel (%p219) target = $region40
        $region39: #{conv_block_forward.3} parent=31 // pred_region
          %222 = dma.done [#allocation6], 64
        $region40: #{conv_block_forward.3} parent=31 // pred_fallthru
          _
        // Predicated region
        $region41: #{conv_block_forward.3} parent=31 // pred_check
          %p223 = pneg %p89
        $region42: #{conv_block_forward.3} parent=31 // pred_check_branch
          %225 = sbr.rel (%p223) target = $region44
        $region43: #{conv_block_forward.3} parent=31 // pred_region
          %226 = dma.done [#allocation6], 512
        $region44: #{conv_block_forward.3} parent=31 // pred_fallthru
          _
        %s227 = sand.u32 %s34, 1
        %s228 = scalar_lea.sflag [#allocation3], %s227
        %s229 = sand.u32 %s34, 1
        %s230 = smul.addr %s229, 8
        %s231 = scalar_lea.vmem [#allocation2], %s230
        %p232 = pneg %p47
        %p233 = pneg %p44
        %p234 = pneg %p68
        %p235 = pneg %p65
        %p236 = pneg %p89
        %p237 = pneg %p86
        %p238 = pneg %p115
        %p239 = pneg %p112
        %s240 = sand.u32 %s102, 1
        %s241 = scalar_lea.sflag [#allocation4], %s240
        %s242 = sand.u32 %s102, 1
        %s243 = smul.addr %s242, 8
        %s244 = scalar_lea.vmem [#allocation8], %s243
        %p245 = pneg %p141
        %p246 = pneg %p138
        %s247 = sand.u32 %s128, 1
        %s248 = scalar_lea.sflag [#allocation10], %s247
        %s249 = sand.u32 %s128, 1
        %s250 = smul.addr %s249, 8
        %s251 = scalar_lea.vmem [#allocation9], %s250
        %v253 = vld [vmem:[%s214] sm:$0xff]
        %v255 = vcombine.high %v253, %v253
        %256 = vrot.lane.b32.xlu0 %v255, 17
        %v257 = vpop.permute.xlu0 %256
        %259 = vrot.lane.b32.xlu0 %v253, 17
        %v260 = vpop.permute.xlu0 %259
        %vm261 = vcmask 138240
        %v262 = vsel %vm261, %v260, %v257
        %v265 = vsel %vm261, %v257, %v260
        %v266 = vld [vmem:[#allocation7] ss:$8 sm:$0x3]
        %v268 = vlaneseq
        %v269 = vshrl.u32 %v268, 7
        %v270 = vsub.s32 0, %v269
        %v271 = vrot.slane %v266, %v270
        %v272 = vlaneseq
        %v273 = vshrl.u32 %v272, 7
        %v274 = vsub.s32 1, %v273
        %v275 = vrot.slane %v266, %v274
        %v278 = vmul.f32 %v265, %v271
        %v279 = vmul.f32 %v262, %v275
        %280 = vrot.lane.b32.xlu0 %v255, 16
        %v281 = vpop.permute.xlu0 %280
        %283 = vrot.lane.b32.xlu0 %v253, 16
        %v284 = vpop.permute.xlu0 %283
        %vm285 = vcmask 130048
        %v286 = vsel %vm285, %v284, %v281
        %v289 = vsel %vm285, %v281, %v284
        %s290 = scalar_lea.vmem [#allocation7], 1
        %v291 = vld [vmem:[%s290] ss:$8 sm:$0x3]
        %v293 = vlaneseq
        %v294 = vshrl.u32 %v293, 7
        %v295 = vsub.s32 0, %v294
        %v296 = vrot.slane %v291, %v295
        %v297 = vlaneseq
        %v298 = vshrl.u32 %v297, 7
        %v299 = vsub.s32 1, %v298
        %v300 = vrot.slane %v291, %v299
        %v303 = vmul.f32 %v289, %v296
        %v304 = vmul.f32 %v286, %v300
        %305 = vrot.lane.b32.xlu0 %v255, 15
        %v306 = vpop.permute.xlu0 %305
        %308 = vrot.lane.b32.xlu0 %v253, 15
        %v309 = vpop.permute.xlu0 %308
        %vm310 = vcmask 121856
        %v311 = vsel %vm310, %v309, %v306
        %v314 = vsel %vm310, %v306, %v309
        %s315 = scalar_lea.vmem [#allocation7], 2
        %v316 = vld [vmem:[%s315] ss:$8 sm:$0x3]
        %v318 = vlaneseq
        %v319 = vshrl.u32 %v318, 7
        %v320 = vsub.s32 0, %v319
        %v321 = vrot.slane %v316, %v320
        %v322 = vlaneseq
        %v323 = vshrl.u32 %v322, 7
        %v324 = vsub.s32 1, %v323
        %v325 = vrot.slane %v316, %v324
        %v328 = vmul.f32 %v314, %v321
        %v329 = vmul.f32 %v311, %v325
        %330 = vrot.lane.b32.xlu0 %v255, 1
        %v331 = vpop.permute.xlu0 %330
        %333 = vrot.lane.b32.xlu0 %v253, 1
        %v334 = vpop.permute.xlu0 %333
        %vm335 = vcmask 7168
        %v336 = vsel %vm335, %v334, %v331
        %v339 = vsel %vm335, %v331, %v334
        %s340 = scalar_lea.vmem [#allocation7], 3
        %v341 = vld [vmem:[%s340] ss:$8 sm:$0x3]
        %v343 = vlaneseq
        %v344 = vshrl.u32 %v343, 7
        %v345 = vsub.s32 0, %v344
        %v346 = vrot.slane %v341, %v345
        %v347 = vlaneseq
        %v348 = vshrl.u32 %v347, 7
        %v349 = vsub.s32 1, %v348
        %v350 = vrot.slane %v341, %v349
        %v353 = vmul.f32 %v339, %v346
        %v354 = vmul.f32 %v336, %v350
        %355 = vrot.lane.b32.xlu0 %v253, 127
        %v356 = vpop.permute.xlu0 %355
        %357 = vrot.lane.b32.xlu0 %v255, 127
        %v358 = vpop.permute.xlu0 %357
        %vm359 = vcmask 1039360
        %v360 = vsel %vm359, %v356, %v358
        %v364 = vsel %vm359, %v358, %v356
        %s365 = scalar_lea.vmem [#allocation7], 5
        %v366 = vld [vmem:[%s365] ss:$8 sm:$0x3]
        %v368 = vlaneseq
        %v369 = vshrl.u32 %v368, 7
        %v370 = vsub.s32 0, %v369
        %v371 = vrot.slane %v366, %v370
        %v372 = vlaneseq
        %v373 = vshrl.u32 %v372, 7
        %v374 = vsub.s32 1, %v373
        %v375 = vrot.slane %v366, %v374
        %v378 = vmul.f32 %v360, %v371
        %v379 = vmul.f32 %v364, %v375
        %380 = vrot.lane.b32.xlu0 %v253, 113
        %v381 = vpop.permute.xlu0 %380
        %382 = vrot.lane.b32.xlu0 %v255, 113
        %v383 = vpop.permute.xlu0 %382
        %vm384 = vcmask 924672
        %v385 = vsel %vm384, %v381, %v383
        %v389 = vsel %vm384, %v383, %v381
        %s390 = scalar_lea.vmem [#allocation7], 6
        %v391 = vld [vmem:[%s390] ss:$8 sm:$0x3]
        %v393 = vlaneseq
        %v394 = vshrl.u32 %v393, 7
        %v395 = vsub.s32 0, %v394
        %v396 = vrot.slane %v391, %v395
        %v397 = vlaneseq
        %v398 = vshrl.u32 %v397, 7
        %v399 = vsub.s32 1, %v398
        %v400 = vrot.slane %v391, %v399
        %v403 = vmul.f32 %v385, %v396
        %v404 = vmul.f32 %v389, %v400
        %405 = vrot.lane.b32.xlu0 %v253, 112
        %v406 = vpop.permute.xlu0 %405
        %407 = vrot.lane.b32.xlu0 %v255, 112
        %v408 = vpop.permute.xlu0 %407
        %vm409 = vcmask 916480
        %v410 = vsel %vm409, %v406, %v408
        %v414 = vsel %vm409, %v408, %v406
        %s415 = scalar_lea.vmem [#allocation7], 7
        %v416 = vld [vmem:[%s415] ss:$8 sm:$0x3]
        %v418 = vlaneseq
        %v419 = vshrl.u32 %v418, 7
        %v420 = vsub.s32 0, %v419
        %v421 = vrot.slane %v416, %v420
        %v422 = vlaneseq
        %v423 = vshrl.u32 %v422, 7
        %v424 = vsub.s32 1, %v423
        %v425 = vrot.slane %v416, %v424
        %v428 = vmul.f32 %v410, %v421
        %v429 = vmul.f32 %v414, %v425
        %430 = vrot.lane.b32.xlu0 %v253, 111
        %v431 = vpop.permute.xlu0 %430
        %432 = vrot.lane.b32.xlu0 %v255, 111
        %v433 = vpop.permute.xlu0 %432
        %vm434 = vcmask 908288
        %v435 = vsel %vm434, %v431, %v433
        %v439 = vsel %vm434, %v433, %v431
        %s440 = scalar_lea.vmem [#allocation7], 16
        %v441 = vld [vmem:[%s440] ss:$8 sm:$0x3]
        %v443 = vlaneseq
        %v444 = vshrl.u32 %v443, 7
        %v445 = vsub.s32 0, %v444
        %v446 = vrot.slane %v441, %v445
        %v447 = vlaneseq
        %v448 = vshrl.u32 %v447, 7
        %v449 = vsub.s32 1, %v448
        %v450 = vrot.slane %v441, %v449
        %v453 = vmul.f32 %v435, %v446
        %v454 = vmul.f32 %v439, %v450
        %v457 = vrot.slane %v303, 4
        %v458 = vrot.slane %v304, 4
        %v463 = vrot.slane %v353, 4
        %v464 = vrot.slane %v354, 4
        %v470 = vrot.slane %v378, 4
        %v471 = vrot.slane %v379, 4
        %v476 = vrot.slane %v428, 4
        %v477 = vrot.slane %v429, 4
        %vm480 = vcmask 1043456
        %v481 = vsel %vm480, %v278, %v457
        %v482 = vsel %vm480, %v279, %v458
        %v483 = vsel %vm480, %v328, %v463
        %v484 = vsel %vm480, %v329, %v464
        %v485 = vsel %vm480, %v253, %v470
        %v486 = vsel %vm480, %v255, %v471
        %v487 = vsel %vm480, %v403, %v476
        %v488 = vsel %vm480, %v404, %v477
        %v489 = vpack.c.bf16 %v483, %v481
        %v490 = vpack.c.bf16 %v484, %v482
        %v491 = vpack.c.bf16 %v487, %v485
        %v492 = vpack.c.bf16 %v488, %v486
        %v493 = vpack.c.bf16 %v453, %v453
        %v494 = vpack.c.bf16 %v454, %v454
        %v495 = vld [vmem:[#allocation5] sm:$0xf]
        %vm496 = vcmask 293888
        %v498 = vsel %vm496, %v495, 0
        %vm500 = vcmask 1041408
        %v502 = vsel %vm500, %v493, 0
        %v505 = vsel %vm500, %v494, 0
        %507 = vmatprep.subr.bf16.mxu0 %v490
        %508 = vmatpush1.bf16.msra.mxu0 %v489
        %509 = vmatprep.subr.bf16.mxu0 %v492
        %510 = vmatpush1.bf16.msra.mxu0 %v491
        %511 = vmatprep.subr.bf16.mxu0 %v505
        %512 = vmatpush1.bf16.msra.mxu0 %v502
        %513 = vmatprep.subr.bf16.mxu0 0
        %514 = vmatpush1.bf16.msra.mxu0 0
        %515 = vmatprep.subr.bf16.mxu0 0
        %516 = vmatpush1.bf16.msra.mxu0 0
        %517 = vmatprep.subr.bf16.mxu0 0
        %518 = vmatpush1.bf16.msra.mxu0 0
        %519 = vmatprep.subr.bf16.mxu0 0
        %520 = vmatpush1.bf16.msra.mxu0 0
        %521 = vmatprep.subr.bf16.mxu0 0
        %522 = vmatpush1.bf16.msra.mxu0 0
        %523 = vmatprep.subr.bf16.mxu0 0
        %524 = vmatpush1.bf16.msra.mxu0 0
        %525 = vmatprep.subr.bf16.mxu0 0
        %526 = vmatpush1.bf16.msra.mxu0 0
        %527 = vmatprep.subr.bf16.mxu0 0
        %528 = vmatpush1.bf16.msra.mxu0 0
        %529 = vmatprep.subr.bf16.mxu0 0
        %530 = vmatpush1.bf16.msra.mxu0 0
        %531 = vmatprep.subr.bf16.mxu0 0
        %532 = vmatpush1.bf16.msra.mxu0 0
        %533 = vmatprep.subr.bf16.mxu0 0
        %534 = vmatpush1.bf16.msra.mxu0 0
        %535 = vmatprep.subr.bf16.mxu0 0
        %536 = vmatpush1.bf16.msra.mxu0 0
        %537 = vmatprep.subr.bf16.mxu0 0
        %538 = vmatpush1.bf16.msra.mxu0 0
        %539 = vmatprep.mubr.bf16.mxu0 0
        %540 = vmatmul.mubr.bf16.gmra.mrb[0].mxu0 %v498
        %v541 = vpop.f32.mrb[0].mxu0
        %v542 = vadd.f32 0.0, %v541
        %v543 = vpop.f32.mrb[0].mxu0
        %v544 = vadd.f32 0.0, %v543
        %v545 = vpop.f32.mrb[0].mxu0
        %v546 = vpop.f32.mrb[0].mxu0
        %547 = vdwg.mxu0
        %v548 = vpack.c.bf16 %v542, %v542
        %v549 = vpack.c.bf16 %v544, %v544
        %v552 = vunpack.c.l.b16 %v548
        %v553 = vunpack.c.l.b16 %v549
        %v554 = vpack.c.b16 %v553, %v552
        %556 = vst [vmem:[%s244] sm:$0xff] %v554
        %v557 = vadd.f32 %v542, %v544
        %558 = vadd.xlane.f32.xlu0 %v557
        %v559 = vpop.xlane.xlu0 %558
        %v560 = vmul.f32 %v559, 0.00390625
        %v561 = vsub.f32 %v542, %v560
        %v562 = vsub.f32 %v544, %v560
        %v563 = vmul.f32 %v561, %v561
        %v564 = vmul.f32 %v562, %v562
        %v565 = vadd.f32 %v563, %v564
        %566 = vadd.xlane.f32.xlu0 %v565
        %v567 = vpop.xlane.xlu0 %566
        %v568 = vsel %vm335, %v560, %v567
        %vm569 = vcmask 15360
        %570 = vst.msk [vmem:[%s251] sm:$0xff] %vm569, %v568
        %s571 = sand.u32 %s102, 1
        %s572 = scalar_lea.sflag [#allocation4], %s571
        %s573 = sand.u32 %s102, 1
        %s574 = smul.addr %s573, 8
        %s575 = scalar_lea.vmem [#allocation8], %s574
        %s576 = sand.u32 %s128, 1
        %s577 = scalar_lea.sflag [#allocation10], %s576
        %s578 = sand.u32 %s128, 1
        %s579 = smul.addr %s578, 8
        %s580 = scalar_lea.vmem [#allocation9], %s579
        // Predicated region
        $region45: #{conv_block_forward.3} parent=31 // pred_check
          %p581 = pneg %p112
        $region46: #{conv_block_forward.3} parent=31 // pred_check_branch
          %583 = sbr.rel (%p581) target = $region48
        $region47: #{conv_block_forward.3} parent=31 // pred_region
          %s585 = ssub.s32 128, 128
          %586 = vsyncadd %s572, %s585
          %s587 = smul.addr %s26, 2
          %s588 = smul.addr %s587, 64
          %s589 = scalar_lea.hbm %s3, %s588
          %s591 = sshll.u32 %s575, 4
          %s592 = int_to_ptr.vmem [resolvable:$true] %s591
          %594 = dma.vmem_to_hbm [thread:$0]  %s592, 128, %s589, %s572
        $region48: #{conv_block_forward.3} parent=31 // pred_fallthru
          _
        // Predicated region
        $region49: #{conv_block_forward.3} parent=31 // pred_check
          %p595 = pneg %p138
        $region50: #{conv_block_forward.3} parent=31 // pred_check_branch
          %597 = sbr.rel (%p595) target = $region52
        $region51: #{conv_block_forward.3} parent=31 // pred_region
          %s599 = ssub.s32 128, 128
          %600 = vsyncadd %s577, %s599
          %s601 = smul.addr %s26, 128
          %s602 = scalar_lea.hbm %s4, %s601
          %s604 = sshll.u32 %s580, 4
          %s605 = int_to_ptr.vmem [resolvable:$true] %s604
          %607 = dma.vmem_to_hbm [thread:$0]  %s605, 128, %s602, %s577
        $region52: #{conv_block_forward.3} parent=31 // pred_fallthru
          _
      $region32: #{conv_block_forward.3} parent=5 // pred_fallthru
        _
      %p608 = scmp.le.s32.totalorder 2, %s21
      // Predicated region
      $region53: #{conv_block_forward.3} parent=5 // pred_check
        %p609 = pneg %p608
      $region54: #{conv_block_forward.3} parent=5 // pred_check_branch
        %611 = sbr.rel (%p609) target = $region56
      $region55: #{conv_block_forward.3} parent=5 // pred_region
        %s612 = ssub.s32 %s21, 2
        // Predicated region
        $region57: #{conv_block_forward.3} parent=55 // pred_check
          %p613 = pneg %p118
        $region58: #{conv_block_forward.3} parent=55 // pred_check_branch
          %615 = sbr.rel (%p613) target = $region60
        $region59: #{conv_block_forward.3} parent=55 // pred_region
          %s616 = sand.u32 %s103, 1
          %s617 = scalar_lea.sflag [#allocation4], %s616
          %s618 = sand.u32 %s103, 1
          %s619 = smul.addr %s618, 8
          %s620 = scalar_lea.vmem [#allocation8], %s619
          %621 = dma.done %s617, 128
        $region60: #{conv_block_forward.3} parent=55 // pred_fallthru
          _
        // Predicated region
        $region61: #{conv_block_forward.3} parent=55 // pred_check
          %p622 = pneg %p144
        $region62: #{conv_block_forward.3} parent=55 // pred_check_branch
          %624 = sbr.rel (%p622) target = $region64
        $region63: #{conv_block_forward.3} parent=55 // pred_region
          %s625 = sand.u32 %s129, 1
          %s626 = scalar_lea.sflag [#allocation10], %s625
          %s627 = sand.u32 %s129, 1
          %s628 = smul.addr %s627, 8
          %s629 = scalar_lea.vmem [#allocation9], %s628
          %630 = dma.done %s626, 128
        $region64: #{conv_block_forward.3} parent=55 // pred_fallthru
          _
      $region56: #{conv_block_forward.3} parent=5 // pred_fallthru
        _
    $region6: #{conv_block_forward.3} parent=1 // loop_footer
      %s25 = sadd.s32 1, %s21
    $region7: #{conv_block_forward.3} parent=1 // loop_footer_branch
      %20 = sbr.rel target = $region3
    $region8: #{conv_block_forward.3} parent=1 // loop_exit
      _
    %631 = vsyncpa [#allocation3], 1
    %s632 = scalar_lea.sflag [#allocation3], 1
    %633 = vsyncpa %s632, 1
    %634 = vsyncpa [#allocation6], 1
    %635 = vsyncpa [#allocation4], 1
    %s636 = scalar_lea.sflag [#allocation4], 1
    %637 = vsyncpa %s636, 1
    %638 = vsyncpa [#allocation10], 1
    %s639 = scalar_lea.sflag [#allocation10], 1
    %640 = vsyncpa %s639, 1

// kernel: conv_block_forward.4
$region0: #{conv_block_forward.4}
  #allocation0 [shape = 'u32[]', space=smem, size = 0x4, offset = 0x4, fixed_abs, tag = 'smem constant byte address 0x4 - core index']
  #allocation1 [shape = 'u32[144,128]{1,0:T(1,128)}', space=vmem, size = 0x12000, scoped, tag = 'internal scratch']
  %s0 = inlined_call_operand.hbm [shape: bf16[2,8,256], index: 0, kind: input, shape index: {}]
  %s1 = inlined_call_operand.hbm [shape: f32[8,1], index: 1, kind: input, shape index: {}]
  %s2 = inlined_call_operand.hbm [shape: f32[8,1], index: 2, kind: input, shape index: {}]
  %s3 = inlined_call_operand.hbm [shape: bf16[8,72], index: 3, kind: input, shape index: {}]
  %s4 = inlined_call_operand.hbm [shape: f32[9,256], index: 4, kind: input, shape index: {}]
  %s5 = inlined_call_operand.hbm [shape: bf16[2,8,256], index: 5, kind: output, shape index: {0}]
  %s6 = inlined_call_operand.hbm [shape: f32[2,8,2], index: 6, kind: output, shape index: {1}]
  %7 = xla_tuple %s5, %s6
  %s8 = sld [smem:[#allocation0]]
  $region81: #{conv_block_forward.4} parent=0
    _
  %s10 = ssub.s32 1, %s8
  %s11 = scalar_select 0, %s10, %s8
  $region1: #{conv_block_forward.4} parent=0
    #allocation2 [shape = 'u8[8192]{0}', space=vmem, size = 0x2000, scoped, tag = 'input window, operand 0']
    #allocation3 [shape = 's32[2]{0}', space=sflag, size = 0x8, scoped, tag = 'scoped memory for conv_block_forward.4']
    #allocation4 [shape = 's32[2]{0}', space=sflag, size = 0x8, scoped, tag = 'scoped memory for conv_block_forward.4']
    #allocation5 [shape = 'u8[4096]{0}', space=vmem, size = 0x1000, scoped, tag = 'input window, operand 1, single buffered']
    #allocation6 [shape = 's32[1]{0}', space=sflag, size = 0x4, scoped, tag = 'scoped memory for conv_block_forward.4']
    #allocation7 [shape = 'u8[4096]{0}', space=vmem, size = 0x1000, scoped, tag = 'input window, operand 2, single buffered']
    #allocation8 [shape = 'u8[2048]{0}', space=vmem, size = 0x800, scoped, tag = 'input window, operand 3, single buffered']
    #allocation9 [shape = 's32[1]{0}', space=sflag, size = 0x4, scoped, tag = 'scoped memory for conv_block_forward.4']
    #allocation10 [shape = 'u8[16384]{0}', space=vmem, size = 0x4000, scoped, tag = 'input window, operand 4, single buffered']
    #allocation11 [shape = 'u8[8192]{0}', space=vmem, size = 0x2000, scoped, tag = 'output window, operand 0']
    #allocation12 [shape = 'u8[8192]{0}', space=vmem, size = 0x2000, scoped, tag = 'output window, operand 1']
    #allocation13 [shape = 's32[2]{0}', space=sflag, size = 0x8, scoped, tag = 'scoped memory for conv_block_forward.4']
    %12 = vsyncpa [#allocation3], 0
    %s13 = scalar_lea.sflag [#allocation3], 1
    %14 = vsyncpa %s13, 0
    %15 = vsyncpa [#allocation6], 0
    %16 = vsyncpa [#allocation9], 0
    %17 = vsyncpa [#allocation4], 0
    %s18 = scalar_lea.sflag [#allocation4], 1
    %19 = vsyncpa %s18, 0
    %20 = vsyncpa [#allocation13], 0
    %s21 = scalar_lea.sflag [#allocation13], 1
    %22 = vsyncpa %s21, 0
    loop: start=0, step=1, limit=4
    $region2: #{conv_block_forward.4} parent=1 // loop_pre_header
      _
    $region3: #{conv_block_forward.4} parent=1 // loop_header
      %s24 = sphi 0, %s28
      %p25 = scmp.ge.s32.totalorder %s24, 4
      %s34 = sphi 0, %s36
      %s37 = sphi 0, %s34
      %s38 = sphi 0, %s37
      %s54 = sphi 0, %s38
      %s58 = sphi 0, %s58
      %s60 = sphi 0, %s58
      %s61 = sphi 0, %s60
      %s75 = sphi 0, %s61
      %s79 = sphi 0, %s79
      %s81 = sphi 0, %s79
      %s82 = sphi 0, %s81
      %s96 = sphi 0, %s82
      %s100 = sphi 0, %s100
      %s102 = sphi 0, %s100
      %s103 = sphi 0, %s102
      %s117 = sphi 0, %s103
      %s121 = sphi 0, %s121
      %s123 = sphi 0, %s121
      %s124 = sphi 0, %s123
      %s138 = sphi 0, %s124
      %s144 = sphi 0, %s146
      %s147 = sphi 0, %s144
      %s148 = sphi 0, %s147
      %s164 = sphi 0, %s148
      %s170 = sphi 0, %s172
      %s173 = sphi 0, %s170
      %s174 = sphi 0, %s173
      %s190 = sphi 0, %s174
    $region4: #{conv_block_forward.4} parent=1 // loop_header_branch
      %27 = sbr.rel (%p25) target = $region8
    $region5: #{conv_block_forward.4} parent=1 // loop_body
      %s29 = ssub.s32 %s24, 1
      %s30 = ssub.s32 %s24, 2
      %s31 = sadd.s32 %s24, 1
      %s32 = ssub.s32 %s24, %s31
      %p33 = scmp.eq.s32.totalorder %s32, 0
      %s35 = sadd.s32 %s34, 1
      %s36 = scalar_select %p33, %s34, %s35
      %p39 = pneg %p33
      %p40 = scmp.eq.s32.totalorder %s24, 1
      %p41 = por %p39, %p40
      %p42 = scmp.ne.s32.totalorder %s34, %s37
      %p43 = scmp.eq.s32.totalorder %s24, 0
      %p44 = por %p42, %p43
      %p45 = scmp.ne.s32.totalorder %s34, %s37
      %p46 = scmp.eq.s32.totalorder %s29, 1
      %p47 = por %p45, %p46
      %p48 = scmp.ne.s32.totalorder %s37, %s38
      %p49 = scmp.eq.s32.totalorder %s29, 0
      %p50 = por %p48, %p49
      %p51 = scmp.ne.s32.totalorder %s37, %s38
      %p52 = scmp.eq.s32.totalorder %s30, 1
      %p53 = por %p51, %p52
      %p55 = scmp.ne.s32.totalorder %s38, %s54
      %p56 = scmp.eq.s32.totalorder %s30, 0
      %p57 = por %p55, %p56
      %s59 = sadd.s32 %s58, 1
      %p62 = scmp.eq.s32.totalorder %s24, 1
      %p63 = scmp.ne.s32.totalorder %s58, %s60
      %p64 = scmp.eq.s32.totalorder %s24, 0
      %p65 = por %p63, %p64
      %p66 = scmp.ne.s32.totalorder %s58, %s60
      %p67 = scmp.eq.s32.totalorder %s29, 1
      %p68 = por %p66, %p67
      %p69 = scmp.ne.s32.totalorder %s60, %s61
      %p70 = scmp.eq.s32.totalorder %s29, 0
      %p71 = por %p69, %p70
      %p72 = scmp.ne.s32.totalorder %s60, %s61
      %p73 = scmp.eq.s32.totalorder %s30, 1
      %p74 = por %p72, %p73
      %p76 = scmp.ne.s32.totalorder %s61, %s75
      %p77 = scmp.eq.s32.totalorder %s30, 0
      %p78 = por %p76, %p77
      %s80 = sadd.s32 %s79, 1
      %p83 = scmp.eq.s32.totalorder %s24, 1
      %p84 = scmp.ne.s32.totalorder %s79, %s81
      %p85 = scmp.eq.s32.totalorder %s24, 0
      %p86 = por %p84, %p85
      %p87 = scmp.ne.s32.totalorder %s79, %s81
      %p88 = scmp.eq.s32.totalorder %s29, 1
      %p89 = por %p87, %p88
      %p90 = scmp.ne.s32.totalorder %s81, %s82
      %p91 = scmp.eq.s32.totalorder %s29, 0
      %p92 = por %p90, %p91
      %p93 = scmp.ne.s32.totalorder %s81, %s82
      %p94 = scmp.eq.s32.totalorder %s30, 1
      %p95 = por %p93, %p94
      %p97 = scmp.ne.s32.totalorder %s82, %s96
      %p98 = scmp.eq.s32.totalorder %s30, 0
      %p99 = por %p97, %p98
      %s101 = sadd.s32 %s100, 1
      %p104 = scmp.eq.s32.totalorder %s24, 1
      %p105 = scmp.ne.s32.totalorder %s100, %s102
      %p106 = scmp.eq.s32.totalorder %s24, 0
      %p107 = por %p105, %p106
      %p108 = scmp.ne.s32.totalorder %s100, %s102
      %p109 = scmp.eq.s32.totalorder %s29, 1
      %p110 = por %p108, %p109
      %p111 = scmp.ne.s32.totalorder %s102, %s103
      %p112 = scmp.eq.s32.totalorder %s29, 0
      %p113 = por %p111, %p112
      %p114 = scmp.ne.s32.totalorder %s102, %s103
      %p115 = scmp.eq.s32.totalorder %s30, 1
      %p116 = por %p114, %p115
      %p118 = scmp.ne.s32.totalorder %s103, %s117
      %p119 = scmp.eq.s32.totalorder %s30, 0
      %p120 = por %p118, %p119
      %s122 = sadd.s32 %s121, 1
      %p125 = scmp.eq.s32.totalorder %s24, 1
      %p126 = scmp.ne.s32.totalorder %s121, %s123
      %p127 = scmp.eq.s32.totalorder %s24, 0
      %p128 = por %p126, %p127
      %p129 = scmp.ne.s32.totalorder %s121, %s123
      %p130 = scmp.eq.s32.totalorder %s29, 1
      %p131 = por %p129, %p130
      %p132 = scmp.ne.s32.totalorder %s123, %s124
      %p133 = scmp.eq.s32.totalorder %s29, 0
      %p134 = por %p132, %p133
      %p135 = scmp.ne.s32.totalorder %s123, %s124
      %p136 = scmp.eq.s32.totalorder %s30, 1
      %p137 = por %p135, %p136
      %p139 = scmp.ne.s32.totalorder %s124, %s138
      %p140 = scmp.eq.s32.totalorder %s30, 0
      %p141 = por %p139, %p140
      %s142 = ssub.s32 %s24, %s31
      %p143 = scmp.eq.s32.totalorder %s142, 0
      %s145 = sadd.s32 %s144, 1
      %s146 = scalar_select %p143, %s144, %s145
      %p149 = pneg %p143
      %p150 = scmp.eq.s32.totalorder %s24, 1
      %p151 = por %p149, %p150
      %p152 = scmp.ne.s32.totalorder %s144, %s147
      %p153 = scmp.eq.s32.totalorder %s24, 0
      %p154 = por %p152, %p153
      %p155 = scmp.ne.s32.totalorder %s144, %s147
      %p156 = scmp.eq.s32.totalorder %s29, 1
      %p157 = por %p155, %p156
      %p158 = scmp.ne.s32.totalorder %s147, %s148
      %p159 = scmp.eq.s32.totalorder %s29, 0
      %p160 = por %p158, %p159
      %p161 = scmp.ne.s32.totalorder %s147, %s148
      %p162 = scmp.eq.s32.totalorder %s30, 1
      %p163 = por %p161, %p162
      %p165 = scmp.ne.s32.totalorder %s148, %s164
      %p166 = scmp.eq.s32.totalorder %s30, 0
      %p167 = por %p165, %p166
      %s168 = ssub.s32 %s24, %s31
      %p169 = scmp.eq.s32.totalorder %s168, 0
      %s171 = sadd.s32 %s170, 1
      %s172 = scalar_select %p169, %s170, %s171
      %p175 = pneg %p169
      %p176 = scmp.eq.s32.totalorder %s24, 1
      %p177 = por %p175, %p176
      %p178 = scmp.ne.s32.totalorder %s170, %s173
      %p179 = scmp.eq.s32.totalorder %s24, 0
      %p180 = por %p178, %p179
      %p181 = scmp.ne.s32.totalorder %s170, %s173
      %p182 = scmp.eq.s32.totalorder %s29, 1
      %p183 = por %p181, %p182
      %p184 = scmp.ne.s32.totalorder %s173, %s174
      %p185 = scmp.eq.s32.totalorder %s29, 0
      %p186 = por %p184, %p185
      %p187 = scmp.ne.s32.totalorder %s173, %s174
      %p188 = scmp.eq.s32.totalorder %s30, 1
      %p189 = por %p187, %p188
      %p191 = scmp.ne.s32.totalorder %s174, %s190
      %p192 = scmp.eq.s32.totalorder %s30, 0
      %p193 = por %p191, %p192
      %p194 = scmp.le.s32.totalorder 1, %s24
      %p195 = scmp.lt.s32.totalorder %s24, 3
      %p196 = pnand %p194, %p195
      %p197 = pneg %p196
      // Predicated region
      $region9: #{conv_block_forward.4} parent=5 // pred_check
        _
      $region10: #{conv_block_forward.4} parent=5 // pred_check_branch
        %199 = sbr.rel (%p196) target = $region12
      $region11: #{conv_block_forward.4} parent=5 // pred_region
        %s200 = ssub.s32 %s24, 1
        // Predicated region
        $region13: #{conv_block_forward.4} parent=11 // pred_check
          %p201 = pneg %p71
        $region14: #{conv_block_forward.4} parent=11 // pred_check_branch
          %203 = sbr.rel (%p201) target = $region16
        $region15: #{conv_block_forward.4} parent=11 // pred_region
          %s205 = ssub.s32 128, 128
          %206 = vsyncadd [#allocation6], %s205
          %s208 = sshll.u32 [#allocation5], 4
          %s209 = int_to_ptr.vmem [resolvable:$true] %s208
          %211 = dma.hbm_to_vmem [thread:$0]  %s1, 128, %s209, [#allocation6]
        $region16: #{conv_block_forward.4} parent=11 // pred_fallthru
          _
        // Predicated region
        $region17: #{conv_block_forward.4} parent=11 // pred_check
          %p212 = pneg %p92
        $region18: #{conv_block_forward.4} parent=11 // pred_check_branch
          %214 = sbr.rel (%p212) target = $region20
        $region19: #{conv_block_forward.4} parent=11 // pred_region
          %s216 = ssub.s32 128, 128
          %217 = vsyncadd [#allocation6], %s216
          %s219 = sshll.u32 [#allocation7], 4
          %s220 = int_to_ptr.vmem [resolvable:$true] %s219
          %222 = dma.hbm_to_vmem [thread:$0]  %s2, 128, %s220, [#allocation6]
        $region20: #{conv_block_forward.4} parent=11 // pred_fallthru
          _
        // Predicated region
        $region21: #{conv_block_forward.4} parent=11 // pred_check
          %p223 = pneg %p113
        $region22: #{conv_block_forward.4} parent=11 // pred_check_branch
          %225 = sbr.rel (%p223) target = $region24
        $region23: #{conv_block_forward.4} parent=11 // pred_region
          %s227 = ssub.s32 64, 64
          %228 = vsyncadd [#allocation9], %s227
          %s230 = sshll.u32 [#allocation8], 4
          %s231 = int_to_ptr.vmem [resolvable:$true] %s230
          %233 = dma.hbm_to_vmem [thread:$0]  %s3, 64, %s231, [#allocation9]
        $region24: #{conv_block_forward.4} parent=11 // pred_fallthru
          _
        // Predicated region
        $region25: #{conv_block_forward.4} parent=11 // pred_check
          %p234 = pneg %p134
        $region26: #{conv_block_forward.4} parent=11 // pred_check_branch
          %236 = sbr.rel (%p234) target = $region28
        $region27: #{conv_block_forward.4} parent=11 // pred_region
          %s238 = ssub.s32 512, 512
          %239 = vsyncadd [#allocation9], %s238
          %s240 = sshll.u32 [#allocation10], 4
          %s241 = int_to_ptr.vmem [resolvable:$true] %s240
          %246 = dma.hbm_to_vmem [thread:$0]  %s4, 512, %s241, [#allocation9], 256, 256, 16
        $region28: #{conv_block_forward.4} parent=11 // pred_fallthru
          _
      $region12: #{conv_block_forward.4} parent=5 // pred_fallthru
        _
      %p247 = scmp.lt.s32.totalorder %s24, 2
      // Predicated region
      $region29: #{conv_block_forward.4} parent=5 // pred_check
        %p248 = pneg %p247
      $region30: #{conv_block_forward.4} parent=5 // pred_check_branch
        %250 = sbr.rel (%p248) target = $region32
      $region31: #{conv_block_forward.4} parent=5 // pred_region
        // Predicated region
        $region33: #{conv_block_forward.4} parent=31 // pred_check
          %p251 = pneg %p44
        $region34: #{conv_block_forward.4} parent=31 // pred_check_branch
          %253 = sbr.rel (%p251) target = $region36
        $region35: #{conv_block_forward.4} parent=31 // pred_region
          %s254 = sand.u32 %s34, 1
          %s255 = scalar_lea.sflag [#allocation3], %s254
          %s256 = sand.u32 %s34, 1
          %s257 = smul.addr %s256, 8
          %s258 = scalar_lea.vmem [#allocation2], %s257
          %s260 = ssub.s32 128, 128
          %261 = vsyncadd %s255, %s260
          %s262 = smul.addr %s24, 2
          %s263 = smul.addr %s262, 64
          %s264 = scalar_lea.hbm %s0, %s263
          %s266 = sshll.u32 %s258, 4
          %s267 = int_to_ptr.vmem [resolvable:$true] %s266
          %269 = dma.hbm_to_vmem [thread:$0]  %s264, 128, %s267, %s255
        $region36: #{conv_block_forward.4} parent=31 // pred_fallthru
          _
      $region32: #{conv_block_forward.4} parent=5 // pred_fallthru
        _
      %p270 = scmp.le.s32.totalorder 1, %s24
      %p271 = scmp.lt.s32.totalorder %s24, 3
      %p272 = pnand %p270, %p271
      %p273 = pneg %p272
      // Predicated region
      $region37: #{conv_block_forward.4} parent=5 // pred_check
        _
      $region38: #{conv_block_forward.4} parent=5 // pred_check_branch
        %275 = sbr.rel (%p272) target = $region40
      $region39: #{conv_block_forward.4} parent=5 // pred_region
        %s276 = ssub.s32 %s24, 1
        %s277 = sand.u32 %s37, 1
        %s278 = scalar_lea.sflag [#allocation3], %s277
        %s279 = sand.u32 %s37, 1
        %s280 = smul.addr %s279, 8
        %s281 = scalar_lea.vmem [#allocation2], %s280
        // Predicated region
        $region41: #{conv_block_forward.4} parent=39 // pred_check
          %p282 = pneg %p50
        $region42: #{conv_block_forward.4} parent=39 // pred_check_branch
          %284 = sbr.rel (%p282) target = $region44
        $region43: #{conv_block_forward.4} parent=39 // pred_region
          %285 = dma.done %s278, 128
        $region44: #{conv_block_forward.4} parent=39 // pred_fallthru
          _
        // Predicated region
        $region45: #{conv_block_forward.4} parent=39 // pred_check
          %p286 = pneg %p71
        $region46: #{conv_block_forward.4} parent=39 // pred_check_branch
          %288 = sbr.rel (%p286) target = $region48
        $region47: #{conv_block_forward.4} parent=39 // pred_region
          %289 = dma.done [#allocation6], 128
        $region48: #{conv_block_forward.4} parent=39 // pred_fallthru
          _
        // Predicated region
        $region49: #{conv_block_forward.4} parent=39 // pred_check
          %p290 = pneg %p92
        $region50: #{conv_block_forward.4} parent=39 // pred_check_branch
          %292 = sbr.rel (%p290) target = $region52
        $region51: #{conv_block_forward.4} parent=39 // pred_region
          %293 = dma.done [#allocation6], 128
        $region52: #{conv_block_forward.4} parent=39 // pred_fallthru
          _
        // Predicated region
        $region53: #{conv_block_forward.4} parent=39 // pred_check
          %p294 = pneg %p113
        $region54: #{conv_block_forward.4} parent=39 // pred_check_branch
          %296 = sbr.rel (%p294) target = $region56
        $region55: #{conv_block_forward.4} parent=39 // pred_region
          %297 = dma.done [#allocation9], 64
        $region56: #{conv_block_forward.4} parent=39 // pred_fallthru
          _
        // Predicated region
        $region57: #{conv_block_forward.4} parent=39 // pred_check
          %p298 = pneg %p134
        $region58: #{conv_block_forward.4} parent=39 // pred_check_branch
          %300 = sbr.rel (%p298) target = $region60
        $region59: #{conv_block_forward.4} parent=39 // pred_region
          %301 = dma.done [#allocation9], 512
        $region60: #{conv_block_forward.4} parent=39 // pred_fallthru
          _
        %s302 = sand.u32 %s37, 1
        %s303 = scalar_lea.sflag [#allocation3], %s302
        %s304 = sand.u32 %s37, 1
        %s305 = smul.addr %s304, 8
        %s306 = scalar_lea.vmem [#allocation2], %s305
        %p307 = pneg %p50
        %p308 = pneg %p47
        %p309 = pneg %p71
        %p310 = pneg %p68
        %p311 = pneg %p92
        %p312 = pneg %p89
        %p313 = pneg %p113
        %p314 = pneg %p110
        %p315 = pneg %p134
        %p316 = pneg %p131
        %p317 = pneg %p160
        %p318 = pneg %p157
        %s319 = sand.u32 %s147, 1
        %s320 = scalar_lea.sflag [#allocation4], %s319
        %s321 = sand.u32 %s147, 1
        %s322 = smul.addr %s321, 8
        %s323 = scalar_lea.vmem [#allocation11], %s322
        %p324 = pneg %p186
        %p325 = pneg %p183
        %s326 = sand.u32 %s173, 1
        %s327 = scalar_lea.sflag [#allocation13], %s326
        %s328 = sand.u32 %s173, 1
        %s329 = smul.addr %s328, 8
        %s330 = scalar_lea.vmem [#allocation12], %s329
        %v332 = vld [vmem:[%s281] sm:$0xff]
        %v333 = vunpack.c.l.bf16 %v332
        %v334 = vunpack.c.h.bf16 %v332
        %v335 = vld [vmem:[#allocation5] sm:$0xff]
        %337 = vset.pattern.permute.xlu0 0
        %338 = vperm.xlu0 %337, %v335
        %v339 = vpop.permute.xlu0 %338
        %v341 = vmul.f32 %v333, %v339
        %v342 = vmul.f32 %v334, %v339
        %v343 = vld [vmem:[#allocation7] sm:$0xff]
        %345 = vset.pattern.permute.xlu0 0
        %346 = vperm.xlu0 %345, %v343
        %v347 = vpop.permute.xlu0 %346
        %v349 = vadd.f32 %v341, %v347
        %v350 = vadd.f32 %v342, %v347
        %v351 = vmax.f32 %v349, 0.0
        %v352 = vmax.f32 %v350, 0.0
        %354 = vrot.lane.b32.xlu0 %v352, 17
        %v355 = vpop.permute.xlu0 %354
        %358 = vrot.lane.b32.xlu0 %v351, 17
        %v359 = vpop.permute.xlu0 %358
        %vm360 = vcmask 138240
        %v361 = vsel %vm360, %v359, %v355
        %v364 = vsel %vm360, %v355, %v359
        %v365 = vld [vmem:[#allocation10] ss:$8 sm:$0x3]
        %v367 = vlaneseq
        %v368 = vshrl.u32 %v367, 7
        %v369 = vsub.s32 0, %v368
        %v370 = vrot.slane %v365, %v369
        %v371 = vlaneseq
        %v372 = vshrl.u32 %v371, 7
        %v373 = vsub.s32 1, %v372
        %v374 = vrot.slane %v365, %v373
        %v377 = vmul.f32 %v364, %v370
        %v378 = vmul.f32 %v361, %v374
        %379 = vrot.lane.b32.xlu0 %v352, 16
        %v380 = vpop.permute.xlu0 %379
        %382 = vrot.lane.b32.xlu0 %v351, 16
        %v383 = vpop.permute.xlu0 %382
        %vm384 = vcmask 130048
        %v385 = vsel %vm384, %v383, %v380
        %v388 = vsel %vm384, %v380, %v383
        %s389 = scalar_lea.vmem [#allocation10], 1
        %v390 = vld [vmem:[%s389] ss:$8 sm:$0x3]
        %v392 = vlaneseq
        %v393 = vshrl.u32 %v392, 7
        %v394 = vsub.s32 0, %v393
        %v395 = vrot.slane %v390, %v394
        %v396 = vlaneseq
        %v397 = vshrl.u32 %v396, 7
        %v398 = vsub.s32 1, %v397
        %v399 = vrot.slane %v390, %v398
        %v402 = vmul.f32 %v388, %v395
        %v403 = vmul.f32 %v385, %v399
        %404 = vrot.lane.b32.xlu0 %v352, 15
        %v405 = vpop.permute.xlu0 %404
        %407 = vrot.lane.b32.xlu0 %v351, 15
        %v408 = vpop.permute.xlu0 %407
        %vm409 = vcmask 121856
        %v410 = vsel %vm409, %v408, %v405
        %v413 = vsel %vm409, %v405, %v408
        %s414 = scalar_lea.vmem [#allocation10], 2
        %v415 = vld [vmem:[%s414] ss:$8 sm:$0x3]
        %v417 = vlaneseq
        %v418 = vshrl.u32 %v417, 7
        %v419 = vsub.s32 0, %v418
        %v420 = vrot.slane %v415, %v419
        %v421 = vlaneseq
        %v422 = vshrl.u32 %v421, 7
        %v423 = vsub.s32 1, %v422
        %v424 = vrot.slane %v415, %v423
        %v427 = vmul.f32 %v413, %v420
        %v428 = vmul.f32 %v410, %v424
        %429 = vrot.lane.b32.xlu0 %v352, 1
        %v430 = vpop.permute.xlu0 %429
        %432 = vrot.lane.b32.xlu0 %v351, 1
        %v433 = vpop.permute.xlu0 %432
        %vm434 = vcmask 7168
        %v435 = vsel %vm434, %v433, %v430
        %v438 = vsel %vm434, %v430, %v433
        %s439 = scalar_lea.vmem [#allocation10], 3
        %v440 = vld [vmem:[%s439] ss:$8 sm:$0x3]
        %v442 = vlaneseq
        %v443 = vshrl.u32 %v442, 7
        %v444 = vsub.s32 0, %v443
        %v445 = vrot.slane %v440, %v444
        %v446 = vlaneseq
        %v447 = vshrl.u32 %v446, 7
        %v448 = vsub.s32 1, %v447
        %v449 = vrot.slane %v440, %v448
        %v452 = vmul.f32 %v438, %v445
        %v453 = vmul.f32 %v435, %v449
        %454 = vrot.lane.b32.xlu0 %v351, 127
        %v455 = vpop.permute.xlu0 %454
        %456 = vrot.lane.b32.xlu0 %v352, 127
        %v457 = vpop.permute.xlu0 %456
        %vm458 = vcmask 1039360
        %v459 = vsel %vm458, %v455, %v457
        %v463 = vsel %vm458, %v457, %v455
        %s464 = scalar_lea.vmem [#allocation10], 5
        %v465 = vld [vmem:[%s464] ss:$8 sm:$0x3]
        %v467 = vlaneseq
        %v468 = vshrl.u32 %v467, 7
        %v469 = vsub.s32 0, %v468
        %v470 = vrot.slane %v465, %v469
        %v471 = vlaneseq
        %v472 = vshrl.u32 %v471, 7
        %v473 = vsub.s32 1, %v472
        %v474 = vrot.slane %v465, %v473
        %v477 = vmul.f32 %v459, %v470
        %v478 = vmul.f32 %v463, %v474
        %479 = vrot.lane.b32.xlu0 %v351, 113
        %v480 = vpop.permute.xlu0 %479
        %481 = vrot.lane.b32.xlu0 %v352, 113
        %v482 = vpop.permute.xlu0 %481
        %vm483 = vcmask 924672
        %v484 = vsel %vm483, %v480, %v482
        %v488 = vsel %vm483, %v482, %v480
        %s489 = scalar_lea.vmem [#allocation10], 6
        %v490 = vld [vmem:[%s489] ss:$8 sm:$0x3]
        %v492 = vlaneseq
        %v493 = vshrl.u32 %v492, 7
        %v494 = vsub.s32 0, %v493
        %v495 = vrot.slane %v490, %v494
        %v496 = vlaneseq
        %v497 = vshrl.u32 %v496, 7
        %v498 = vsub.s32 1, %v497
        %v499 = vrot.slane %v490, %v498
        %v502 = vmul.f32 %v484, %v495
        %v503 = vmul.f32 %v488, %v499
        %504 = vrot.lane.b32.xlu0 %v351, 112
        %v505 = vpop.permute.xlu0 %504
        %506 = vrot.lane.b32.xlu0 %v352, 112
        %v507 = vpop.permute.xlu0 %506
        %vm508 = vcmask 916480
        %v509 = vsel %vm508, %v505, %v507
        %v513 = vsel %vm508, %v507, %v505
        %s514 = scalar_lea.vmem [#allocation10], 7
        %v515 = vld [vmem:[%s514] ss:$8 sm:$0x3]
        %v517 = vlaneseq
        %v518 = vshrl.u32 %v517, 7
        %v519 = vsub.s32 0, %v518
        %v520 = vrot.slane %v515, %v519
        %v521 = vlaneseq
        %v522 = vshrl.u32 %v521, 7
        %v523 = vsub.s32 1, %v522
        %v524 = vrot.slane %v515, %v523
        %v527 = vmul.f32 %v509, %v520
        %v528 = vmul.f32 %v513, %v524
        %529 = vrot.lane.b32.xlu0 %v351, 111
        %v530 = vpop.permute.xlu0 %529
        %531 = vrot.lane.b32.xlu0 %v352, 111
        %v532 = vpop.permute.xlu0 %531
        %vm533 = vcmask 908288
        %v534 = vsel %vm533, %v530, %v532
        %v538 = vsel %vm533, %v532, %v530
        %s539 = scalar_lea.vmem [#allocation10], 16
        %v540 = vld [vmem:[%s539] ss:$8 sm:$0x3]
        %v542 = vlaneseq
        %v543 = vshrl.u32 %v542, 7
        %v544 = vsub.s32 0, %v543
        %v545 = vrot.slane %v540, %v544
        %v546 = vlaneseq
        %v547 = vshrl.u32 %v546, 7
        %v548 = vsub.s32 1, %v547
        %v549 = vrot.slane %v540, %v548
        %v552 = vmul.f32 %v534, %v545
        %v553 = vmul.f32 %v538, %v549
        %v554 = vpack.c.bf16 %v402, %v377
        %v555 = vpack.c.bf16 %v403, %v378
        %v556 = vpack.c.bf16 %v452, %v427
        %v557 = vpack.c.bf16 %v453, %v428
        %v558 = vpack.c.bf16 %v477, %v351
        %v559 = vpack.c.bf16 %v478, %v352
        %v560 = vpack.c.bf16 %v527, %v502
        %v561 = vpack.c.bf16 %v528, %v503
        %v562 = vpack.c.bf16 %v552, %v552
        %v563 = vpack.c.bf16 %v553, %v553
        %v564 = vld [vmem:[#allocation8] sm:$0xf]
        %vm565 = vcmask 588800
        %v567 = vsel %vm565, %v564, 0
        %vm569 = vcmask 1043456
        %v571 = vsel %vm569, %v562, 0
        %v574 = vsel %vm569, %v563, 0
        %576 = vmatprep.subr.bf16.mxu0 %v555
        %577 = vmatpush1.bf16.msra.mxu0 %v554
        %578 = vmatprep.subr.bf16.mxu0 %v557
        %579 = vmatpush1.bf16.msra.mxu0 %v556
        %580 = vmatprep.subr.bf16.mxu0 %v559
        %581 = vmatpush1.bf16.msra.mxu0 %v558
        %582 = vmatprep.subr.bf16.mxu0 %v561
        %583 = vmatpush1.bf16.msra.mxu0 %v560
        %584 = vmatprep.subr.bf16.mxu0 %v574
        %585 = vmatpush1.bf16.msra.mxu0 %v571
        %586 = vmatprep.subr.bf16.mxu0 0
        %587 = vmatpush1.bf16.msra.mxu0 0
        %588 = vmatprep.subr.bf16.mxu0 0
        %589 = vmatpush1.bf16.msra.mxu0 0
        %590 = vmatprep.subr.bf16.mxu0 0
        %591 = vmatpush1.bf16.msra.mxu0 0
        %592 = vmatprep.subr.bf16.mxu0 0
        %593 = vmatpush1.bf16.msra.mxu0 0
        %594 = vmatprep.subr.bf16.mxu0 0
        %595 = vmatpush1.bf16.msra.mxu0 0
        %596 = vmatprep.subr.bf16.mxu0 0
        %597 = vmatpush1.bf16.msra.mxu0 0
        %598 = vmatprep.subr.bf16.mxu0 0
        %599 = vmatpush1.bf16.msra.mxu0 0
        %600 = vmatprep.subr.bf16.mxu0 0
        %601 = vmatpush1.bf16.msra.mxu0 0
        %602 = vmatprep.subr.bf16.mxu0 0
        %603 = vmatpush1.bf16.msra.mxu0 0
        %604 = vmatprep.subr.bf16.mxu0 0
        %605 = vmatpush1.bf16.msra.mxu0 0
        %606 = vmatprep.subr.bf16.mxu0 0
        %607 = vmatpush1.bf16.msra.mxu0 0
        %608 = vmatprep.mubr.bf16.mxu0 0
        %609 = vmatmul.mubr.bf16.gmra.mrb[0].mxu0 %v567
        %v610 = vpop.f32.mrb[0].mxu0
        %v611 = vadd.f32 0.0, %v610
        %v612 = vpop.f32.mrb[0].mxu0
        %v613 = vadd.f32 0.0, %v612
        %v614 = vpop.f32.mrb[0].mxu0
        %v615 = vpop.f32.mrb[0].mxu0
        %616 = vdwg.mxu0
        %v617 = vpack.c.bf16 %v611, %v611
        %v618 = vpack.c.bf16 %v613, %v613
        %v621 = vunpack.c.l.b16 %v617
        %v622 = vunpack.c.l.b16 %v618
        %v623 = vpack.c.b16 %v622, %v621
        %625 = vst [vmem:[%s323] sm:$0xff] %v623
        %v626 = vadd.f32 %v611, %v613
        %627 = vadd.xlane.f32.xlu0 %v626
        %v628 = vpop.xlane.xlu0 %627
        %v629 = vmul.f32 %v628, 0.00390625
        %v630 = vsub.f32 %v611, %v629
        %v631 = vsub.f32 %v613, %v629
        %v632 = vmul.f32 %v630, %v630
        %v633 = vmul.f32 %v631, %v631
        %v634 = vadd.f32 %v632, %v633
        %635 = vadd.xlane.f32.xlu0 %v634
        %v636 = vpop.xlane.xlu0 %635
        %v637 = vsel %vm434, %v629, %v636
        %vm638 = vcmask 15360
        %639 = vst.msk [vmem:[%s330] sm:$0xff] %vm638, %v637
        %s640 = sand.u32 %s147, 1
        %s641 = scalar_lea.sflag [#allocation4], %s640
        %s642 = sand.u32 %s147, 1
        %s643 = smul.addr %s642, 8
        %s644 = scalar_lea.vmem [#allocation11], %s643
        %s645 = sand.u32 %s173, 1
        %s646 = scalar_lea.sflag [#allocation13], %s645
        %s647 = sand.u32 %s173, 1
        %s648 = smul.addr %s647, 8
        %s649 = scalar_lea.vmem [#allocation12], %s648
        // Predicated region
        $region61: #{conv_block_forward.4} parent=39 // pred_check
          %p650 = pneg %p157
        $region62: #{conv_block_forward.4} parent=39 // pred_check_branch
          %652 = sbr.rel (%p650) target = $region64
        $region63: #{conv_block_forward.4} parent=39 // pred_region
          %s654 = ssub.s32 128, 128
          %655 = vsyncadd %s641, %s654
          %s656 = smul.addr %s29, 2
          %s657 = smul.addr %s656, 64
          %s658 = scalar_lea.hbm %s5, %s657
          %s660 = sshll.u32 %s644, 4
          %s661 = int_to_ptr.vmem [resolvable:$true] %s660
          %663 = dma.vmem_to_hbm [thread:$0]  %s661, 128, %s658, %s641
        $region64: #{conv_block_forward.4} parent=39 // pred_fallthru
          _
        // Predicated region
        $region65: #{conv_block_forward.4} parent=39 // pred_check
          %p664 = pneg %p183
        $region66: #{conv_block_forward.4} parent=39 // pred_check_branch
          %666 = sbr.rel (%p664) target = $region68
        $region67: #{conv_block_forward.4} parent=39 // pred_region
          %s668 = ssub.s32 128, 128
          %669 = vsyncadd %s646, %s668
          %s670 = smul.addr %s29, 128
          %s671 = scalar_lea.hbm %s6, %s670
          %s673 = sshll.u32 %s649, 4
          %s674 = int_to_ptr.vmem [resolvable:$true] %s673
          %676 = dma.vmem_to_hbm [thread:$0]  %s674, 128, %s671, %s646
        $region68: #{conv_block_forward.4} parent=39 // pred_fallthru
          _
      $region40: #{conv_block_forward.4} parent=5 // pred_fallthru
        _
      %p677 = scmp.le.s32.totalorder 2, %s24
      // Predicated region
      $region69: #{conv_block_forward.4} parent=5 // pred_check
        %p678 = pneg %p677
      $region70: #{conv_block_forward.4} parent=5 // pred_check_branch
        %680 = sbr.rel (%p678) target = $region72
      $region71: #{conv_block_forward.4} parent=5 // pred_region
        %s681 = ssub.s32 %s24, 2
        // Predicated region
        $region73: #{conv_block_forward.4} parent=71 // pred_check
          %p682 = pneg %p163
        $region74: #{conv_block_forward.4} parent=71 // pred_check_branch
          %684 = sbr.rel (%p682) target = $region76
        $region75: #{conv_block_forward.4} parent=71 // pred_region
          %s685 = sand.u32 %s148, 1
          %s686 = scalar_lea.sflag [#allocation4], %s685
          %s687 = sand.u32 %s148, 1
          %s688 = smul.addr %s687, 8
          %s689 = scalar_lea.vmem [#allocation11], %s688
          %690 = dma.done %s686, 128
        $region76: #{conv_block_forward.4} parent=71 // pred_fallthru
          _
        // Predicated region
        $region77: #{conv_block_forward.4} parent=71 // pred_check
          %p691 = pneg %p189
        $region78: #{conv_block_forward.4} parent=71 // pred_check_branch
          %693 = sbr.rel (%p691) target = $region80
        $region79: #{conv_block_forward.4} parent=71 // pred_region
          %s694 = sand.u32 %s174, 1
          %s695 = scalar_lea.sflag [#allocation13], %s694
          %s696 = sand.u32 %s174, 1
          %s697 = smul.addr %s696, 8
          %s698 = scalar_lea.vmem [#allocation12], %s697
          %699 = dma.done %s695, 128
        $region80: #{conv_block_forward.4} parent=71 // pred_fallthru
          _
      $region72: #{conv_block_forward.4} parent=5 // pred_fallthru
        _
    $region6: #{conv_block_forward.4} parent=1 // loop_footer
      %s28 = sadd.s32 1, %s24
    $region7: #{conv_block_forward.4} parent=1 // loop_footer_branch
      %23 = sbr.rel target = $region3
    $region8: #{conv_block_forward.4} parent=1 // loop_exit
      _
    %700 = vsyncpa [#allocation3], 1
    %s701 = scalar_lea.sflag [#allocation3], 1
    %702 = vsyncpa %s701, 1
    %703 = vsyncpa [#allocation6], 1
    %704 = vsyncpa [#allocation9], 1
    %705 = vsyncpa [#allocation4], 1
    %s706 = scalar_lea.sflag [#allocation4], 1
    %707 = vsyncpa %s706, 1
    %708 = vsyncpa [#allocation13], 1
    %s709 = scalar_lea.sflag [#allocation13], 1
    %710 = vsyncpa %s709, 1

</llo_original>
